<compile_context>
chip_gen: v6e
topology: v6e:2x2x1
jax: 0.10.0
libtpu: 0.0.40
codegen_flags: <defaults>
</compile_context>

<pallas_src>
import jax
import jax.numpy as jnp
from jax.experimental import pallas as pl
from jax.experimental.pallas import tpu as pltpu

CAT_SPEC = [(1115, 80), (7, 4), (3, 3), (12, 6), (31, 10), (2, 2), (25, 10), (26, 10),
            (4, 3), (3, 3), (4, 3), (23, 9), (8, 4), (12, 6), (52, 15), (22, 9),
            (6, 4), (6, 4), (3, 3), (3, 3), (8, 4), (8, 4)]
N_CAT = len(CAT_SPEC)                       # 22
EMB_TOTAL = sum(d for _, d in CAT_SPEC)     # 199
N_CONT = 16
IN_FEATS = EMB_TOTAL + N_CONT               # 215 (matches nn.Linear(215, 1000))
H1, H2 = 1000, 500
BN_EPS = 1e-5

# Hardware-friendly padded sizes (zero-padded; ReLU keeps padded channels exactly 0).
PAD_IN = 256
PAD_H1 = 1024
PAD_H2 = 512
OUT_PAD = 128                               # final layer padded to 128 lanes (unmasked vst)

# Element offsets of each embedding table inside the packed flat table.
FLAT_OFF = []
_off = 0
for _n, _d in CAT_SPEC:
    FLAT_OFF.append(_off)
    _off += _n * _d
EMB_FLAT_SIZE = _off

# Default batch tile: good on v5e/v6e (amortizes per-step overhead) and safely inside v7x's
# 64 MiB physical VMEM (~15 MiB per-step footprint incl. double buffers).
DEFAULT_TB = 1024
TILE_ALIGN = 16                             # 16-row alignment -> clean bf16 sublane packing
VMEM_LIMIT_BYTES = 48 * 1024 * 1024


def _round_up(x, m):
    return (x + m - 1) // m * m


def _choose_tile(batch, tb):
    """Pick a batch tile: multiple of 16, <= padded batch, and >=2 grid tiles when possible
    so the 'parallel' grid axis can shard across both v7x TensorCores."""
    tb = max(TILE_ALIGN, min(tb, _round_up(batch, TILE_ALIGN)))
    tb = _round_up(tb, TILE_ALIGN)
    if batch > TILE_ALIGN and _round_up(batch, tb) // tb < 2:
        tb = _round_up(-(-batch // 2), TILE_ALIGN)
    return tb


# ----------------------------- Pallas kernel (hot path) -----------------------------
def _mlp_kernel(x_ref, w1_ref, b1_ref, w2_ref, b2_ref, w3_ref, b3_ref, o_ref):
    # Linear(256 -> 1024) + ReLU   (cont-BN folded into w1/b1; x already bf16)
    h = jnp.dot(x_ref[...], w1_ref[...], preferred_element_type=jnp.float32) + b1_ref[...]
    h = jnp.maximum(h, 0.0)
    # Dropout(p=0.001): identity in eval mode.
    # BN1-folded Linear(1024 -> 512) + ReLU
    h = jnp.dot(h.astype(jnp.bfloat16), w2_ref[...],
                preferred_element_type=jnp.float32) + b2_ref[...]
    h = jnp.maximum(h, 0.0)
    # Dropout(p=0.01): identity in eval mode.
    # BN2-folded Linear(512 -> 1), padded to 128 output lanes -> lane-dense unmasked stores.
    o_ref[...] = jnp.dot(h.astype(jnp.bfloat16), w3_ref[...],
                         preferred_element_type=jnp.float32) + b3_ref[...]


def mlp_forward(feats, fused, tb=DEFAULT_TB):
    """feats: (B, 256) bfloat16 -> (B, 1) float32 via a batch-tiled fused Pallas kernel."""
    B = feats.shape[0]
    tb = _choose_tile(B, tb)
    Bp = _round_up(B, tb)
    if Bp != B:
        feats = jnp.pad(feats, ((0, Bp - B), (0, 0)))
    grid = (Bp // tb,)

    flops = 2 * Bp * (PAD_IN * PAD_H1 + PAD_H1 * PAD_H2 + PAD_H2 * OUT_PAD)
    bytes_accessed = (Bp * PAD_IN * 2                                     # bf16 activations in
                      + (fused["w1"].size + fused["w2"].size + fused["w3"].size) * 2
                      + (PAD_H1 + PAD_H2 + OUT_PAD) * 4                   # biases
                      + Bp * OUT_PAD * 4)                                 # padded output

    # NOTE: weight/bias specs have constant index_maps so their blocks are fetched once and
    # kept resident; single-buffering them (pl.Buffered(1)) would only reclaim ~1.7 MiB and
    # is unnecessary at this footprint.
    out = pl.pallas_call(
        _mlp_kernel,
        out_shape=jax.ShapeDtypeStruct((Bp, OUT_PAD), jnp.float32),
        grid=grid,
        in_specs=[
            pl.BlockSpec((tb, PAD_IN), lambda i: (i, 0)),       # bf16 activations, batch-tiled
            pl.BlockSpec((PAD_IN, PAD_H1), lambda i: (0, 0)),   # weights stay VMEM-resident
            pl.BlockSpec((1, PAD_H1), lambda i: (0, 0)),
            pl.BlockSpec((PAD_H1, PAD_H2), lambda i: (0, 0)),
            pl.BlockSpec((1, PAD_H2), lambda i: (0, 0)),
            pl.BlockSpec((PAD_H2, OUT_PAD), lambda i: (0, 0)),
            pl.BlockSpec((1, OUT_PAD), lambda i: (0, 0)),
        ],
        out_specs=pl.BlockSpec((tb, OUT_PAD), lambda i: (i, 0)),
        compiler_params=pltpu.CompilerParams(
            dimension_semantics=("parallel",),                  # shard batch tiles across TCs
            vmem_limit_bytes=VMEM_LIMIT_BYTES,
        ),
        cost_estimate=pl.CostEstimate(flops=flops, transcendentals=0,
                                      bytes_accessed=bytes_accessed),
    )(feats, fused["w1"], fused["b1"], fused["w2"], fused["b2"],
      fused["w3"], fused["b3"])
    return out[:B, :1]


# ----------------------------- parameter initialization -----------------------------
def _folded_bn(key, n):
    k1, k2, k3, k4 = jax.random.split(key, 4)
    gamma = 1.0 + 0.1 * jax.random.normal(k1, (n,))
    beta = 0.1 * jax.random.normal(k2, (n,))
    running_mean = 0.1 * jax.random.normal(k3, (n,))
    running_var = jnp.abs(jax.random.normal(k4, (n,))) + 0.5
    scale = gamma / jnp.sqrt(running_var + BN_EPS)
    shift = beta - running_mean * scale
    return (scale.reshape(1, n).astype(jnp.float32),
            shift.reshape(1, n).astype(jnp.float32))


def _linear(key, fan_in, fan_out):
    k1, k2 = jax.random.split(key)
    bound = 1.0 / float(fan_in) ** 0.5
    w = jax.random.uniform(k1, (fan_in, fan_out), jnp.float32, -bound, bound)
    b = jax.random.uniform(k2, (1, fan_out), jnp.float32, -bound, bound)
    return w, b


def init_params(key):
    keys = jax.random.split(key, N_CAT + 6)
    params = {}
    # nn.Embedding default init: N(0, 1)
    params["emb"] = [jax.random.normal(keys[i], (n, d), jnp.float32)
                     for i, (n, d) in enumerate(CAT_SPEC)]
    params["w1"], params["b1"] = _linear(keys[N_CAT + 0], IN_FEATS, H1)
    params["w2"], params["b2"] = _linear(keys[N_CAT + 1], H1, H2)
    params["w3"], params["b3"] = _linear(keys[N_CAT + 2], H2, 1)
    params["bn_cont_scale"], params["bn_cont_shift"] = _folded_bn(keys[N_CAT + 3], N_CONT)
    params["bn1_scale"], params["bn1_shift"] = _folded_bn(keys[N_CAT + 4], H1)
    params["bn2_scale"], params["bn2_shift"] = _folded_bn(keys[N_CAT + 5], H2)
    return params


def prepare_fused_params(params):
    """Pack embedding tables (bf16), fold cont-BN/BN1/BN2 into the Linears, zero-pad every
    matmul dim to (256, 1024, 512, 128), and cast weights to bf16."""
    emb_flat = jnp.concatenate([t.reshape(-1) for t in params["emb"]]).astype(jnp.bfloat16)

    sc, tc = params["bn_cont_scale"], params["bn_cont_shift"]   # (1, 16)
    s1, t1 = params["bn1_scale"], params["bn1_shift"]            # (1, H1)
    s2, t2 = params["bn2_scale"], params["bn2_shift"]            # (1, H2)

    # cont BatchNorm folded into layer 1 (scale the 16 continuous-feature rows of w1).
    w1 = params["w1"]
    w1f = w1.at[EMB_TOTAL:, :].multiply(sc.reshape(-1, 1))       # (215, 1000)
    b1f = params["b1"] + tc @ w1[EMB_TOTAL:, :]                  # (1, 1000)
    # BN1 folded into layer 2, BN2 folded into layer 3 (module order: Linear->ReLU->BN).
    w2f = params["w2"] * s1.reshape(-1, 1)                       # (1000, 500)
    b2f = params["b2"] + t1 @ params["w2"]                       # (1, 500)
    w3f = params["w3"] * s2.reshape(-1, 1)                       # (500, 1)
    b3f = params["b3"] + t2 @ params["w3"]                       # (1, 1)

    # Zero-pad to lane-dense shapes; padded channels stay exactly 0 through ReLU.
    w1p = jnp.zeros((PAD_IN, PAD_H1), jnp.float32).at[:IN_FEATS, :H1].set(w1f)
    b1p = jnp.zeros((1, PAD_H1), jnp.float32).at[:, :H1].set(b1f)
    w2p = jnp.zeros((PAD_H1, PAD_H2), jnp.float32).at[:H1, :H2].set(w2f)
    b2p = jnp.zeros((1, PAD_H2), jnp.float32).at[:, :H2].set(b2f)
    w3p = jnp.zeros((PAD_H2, OUT_PAD), jnp.float32).at[:H2, 0:1].set(w3f)
    b3p = jnp.zeros((1, OUT_PAD), jnp.float32).at[:, 0:1].set(b3f)

    return {
        "emb_flat": emb_flat,
        "w1": w1p.astype(jnp.bfloat16), "b1": b1p,
        "w2": w2p.astype(jnp.bfloat16), "b2": b2p,
        "w3": w3p.astype(jnp.bfloat16), "b3": b3p,
    }


# ----------------------------- forward (glue + kernel) -----------------------------
def _build_feats(x, fused):
    """Build the (B, 256) bfloat16 feature slab.

    The PyTorch code does, per table:  out = emb(col).view(d, B, 1).squeeze()  (a raw buffer
    reinterpretation, NOT a transpose), concatenates along dim 0, then .view((B, 199)).
    That is equivalent to: flatten each (B, d_k) embedding output row-major, concatenate the
    flat buffers table-major, and reshape to (B, 199) row-major — implemented here as a
    SINGLE gather on a packed flat bf16 embedding table.  The 16 continuous columns are
    appended raw (their BatchNorm is folded into w1/b1), then 41 zero lanes pad to 256.
    """
    B = x.shape[0]
    idx_cols = x[:, :N_CAT].astype(jnp.int32)                   # .long() in torch
    gather_parts = []
    for k, (_, d) in enumerate(CAT_SPEC):
        gi = (FLAT_OFF[k]
              + idx_cols[:, k:k + 1] * d
              + jnp.arange(d, dtype=jnp.int32)[None, :]).reshape(-1)        # (B*d_k,)
        gather_parts.append(gi)
    gidx = jnp.concatenate(gather_parts)                        # (B*199,) table-major order
    out_cat = jnp.take(fused["emb_flat"], gidx, axis=0).reshape(B, EMB_TOTAL)
    # embedding_dropout(p=0.04): identity in eval mode.
    cont = x[:, N_CAT:].astype(jnp.bfloat16)                    # (B, 16)
    pad = jnp.zeros((B, PAD_IN - IN_FEATS), jnp.bfloat16)       # (B, 41)
    return jnp.concatenate([out_cat, cont, pad], axis=1)        # (B, 256) bf16


def forward(x, params, fused, tb=DEFAULT_TB):
    """Reproduces FeedforwardTabularModel.forward (eval mode). x: (B, 38) float32."""
    del params  # all eval-mode parameters are pre-folded into `fused`
    feats = _build_feats(x, fused)
    return mlp_forward(feats, fused, tb=tb)


# ----------------------------- references for validation -----------------------------
def _reference_mlp_fused(feats, fp):
    """Pure-JAX mirror of the kernel math (folded BN, padded bf16 operands, f32 accum)."""
    h = jnp.maximum(jnp.dot(feats, fp["w1"],
                            preferred_element_type=jnp.float32) + fp["b1"], 0.0)
    h = jnp.maximum(jnp.dot(h.astype(jnp.bfloat16), fp["w2"],
                            preferred_element_type=jnp.float32) + fp["b2"], 0.0)
    o = jnp.dot(h.astype(jnp.bfloat16), fp["w3"],
                preferred_element_type=jnp.float32) + fp["b3"]
    return o[:, :1]


def _reference_f32(x, p):
    """Unfolded float32 reference (original module math, eval mode)."""
    B = x.shape[0]
    flat_parts = []
    for k, (_, d) in enumerate(CAT_SPEC):
        idx = x[:, k].astype(jnp.int32)
        flat_parts.append(p["emb"][k][idx].reshape(-1))
    out_cat = jnp.concatenate(flat_parts).reshape(B, EMB_TOTAL)
    out_cont = x[:, N_CAT:] * p["bn_cont_scale"] + p["bn_cont_shift"]
    feats = jnp.concatenate([out_cat, out_cont], axis=1)
    h = jnp.maximum(feats @ p["w1"] + p["b1"], 0.0) * p["bn1_scale"] + p["bn1_shift"]
    h = jnp.maximum(h @ p["w2"] + p["b2"], 0.0) * p["bn2_scale"] + p["bn2_shift"]
    return h @ p["w3"] + p["b3"]


if __name__ == "__main__":
    key = jax.random.PRNGKey(0)
    kp, kc, kx = jax.random.split(key, 3)
    params = init_params(kp)
    fused = prepare_fused_params(params)

    # Small deterministic (B, 38) float32 input: 22 categorical index columns + 16 continuous.
    # B=50 with tb=16 exercises the batch grid (4 tiles) and the padding/slicing path.
    B = 50
    cat_keys = jax.random.split(kc, N_CAT)
    cat_cols = [jax.random.randint(cat_keys[i], (B,), 0, n).astype(jnp.float32)
                for i, (n, _) in enumerate(CAT_SPEC)]
    cont_cols = jax.random.normal(kx, (B, N_CONT), jnp.float32)
    x = jnp.concatenate([jnp.stack(cat_cols, axis=1), cont_cols], axis=1)   # (B, 38)

    fwd = jax.jit(lambda xx: forward(xx, params, fused, tb=16))
    out = jax.block_until_ready(fwd(x))
    assert out.shape == (B, 1) and out.dtype == jnp.float32

    # Validate: (a) exact-math mirror of the kernel (tight), (b) original f32 module (loose,
    # accounting for bf16 weights/activations).
    feats = _build_feats(x, fused)
    ref_tight = _reference_mlp_fused(feats, fused)
    ref_f32 = _reference_f32(x, params)
    assert jnp.allclose(out, ref_tight, atol=2e-3, rtol=2e-3), "mismatch vs matched bf16 reference"
    assert jnp.allclose(out, ref_f32, atol=1e-1, rtol=1e-1), "mismatch vs f32 reference"

    print("KERNEL_OK")
</pallas_src>

<mosaic_0001>
module attributes {stable_mosaic.version = 11 : i64} {
  func.func @_mlp_kernel(%arg0: i32, %arg1: memref<16x256xbf16, #tpu.memory_space<vmem>>, %arg2: memref<256x1024xbf16, #tpu.memory_space<vmem>>, %arg3: memref<1x1024xf32, #tpu.memory_space<vmem>>, %arg4: memref<1024x512xbf16, #tpu.memory_space<vmem>>, %arg5: memref<1x512xf32, #tpu.memory_space<vmem>>, %arg6: memref<512x128xbf16, #tpu.memory_space<vmem>>, %arg7: memref<1x128xf32, #tpu.memory_space<vmem>>, %arg8: memref<16x128xf32, #tpu.memory_space<vmem>>) attributes {dimension_semantics = [#tpu.dimension_semantics<parallel>], iteration_bounds = array<i64: 4>, scalar_prefetch = 0 : i64, scratch_operands = 0 : i64, tpu.core_type = #tpu.core_type<tc>, window_params = [{transform_indices = @transform_0, window_bounds = array<i64: 16, 256>}, {pipeline_mode = #tpu.pipeline_mode<synchronous>, transform_indices = @transform_1, window_bounds = array<i64: 256, 1024>}, {pipeline_mode = #tpu.pipeline_mode<synchronous>, transform_indices = @transform_2, window_bounds = array<i64: 1, 1024>}, {pipeline_mode = #tpu.pipeline_mode<synchronous>, transform_indices = @transform_3, window_bounds = array<i64: 1024, 512>}, {pipeline_mode = #tpu.pipeline_mode<synchronous>, transform_indices = @transform_4, window_bounds = array<i64: 1, 512>}, {pipeline_mode = #tpu.pipeline_mode<synchronous>, transform_indices = @transform_5, window_bounds = array<i64: 512, 128>}, {pipeline_mode = #tpu.pipeline_mode<synchronous>, transform_indices = @transform_6, window_bounds = array<i64: 1, 128>}, {transform_indices = @transform_7, window_bounds = array<i64: 16, 128>}]} {
    %c0 = arith.constant 0 : index
    %c0_0 = arith.constant 0 : index
    %0 = vector.load %arg1[%c0, %c0_0] : memref<16x256xbf16, #tpu.memory_space<vmem>>, vector<16x256xbf16>
    %c0_1 = arith.constant 0 : index
    %c0_2 = arith.constant 0 : index
    %1 = vector.load %arg2[%c0_1, %c0_2] : memref<256x1024xbf16, #tpu.memory_space<vmem>>, vector<256x1024xbf16>
    %cst = arith.constant dense<0.000000e+00> : vector<16x1024xf32>
    %2 = tpu.matmul %0, %1, %cst {dimension_numbers = #tpu.dot_dimension_numbers<[1], [0], [0], [1], [0, 0, 1, 1], [], []>} : vector<16x256xbf16>, vector<256x1024xbf16>, vector<16x1024xf32> -> vector<16x1024xf32>
    %c0_3 = arith.constant 0 : index
    %c0_4 = arith.constant 0 : index
    %3 = vector.load %arg3[%c0_3, %c0_4] : memref<1x1024xf32, #tpu.memory_space<vmem>>, vector<1x1024xf32>
    %4 = vector.broadcast %3 : vector<1x1024xf32> to vector<16x1024xf32>
    %5 = arith.addf %2, %4 : vector<16x1024xf32>
    %cst_5 = arith.constant 0.000000e+00 : f32
    %6 = vector.broadcast %cst_5 : f32 to vector<16x1024xf32>
    %7 = arith.maximumf %5, %6 : vector<16x1024xf32>
    %8 = arith.truncf %7 : vector<16x1024xf32> to vector<16x1024xbf16>
    %c0_6 = arith.constant 0 : index
    %c0_7 = arith.constant 0 : index
    %9 = vector.load %arg4[%c0_6, %c0_7] : memref<1024x512xbf16, #tpu.memory_space<vmem>>, vector<1024x512xbf16>
    %cst_8 = arith.constant dense<0.000000e+00> : vector<16x512xf32>
    %10 = tpu.matmul %8, %9, %cst_8 {dimension_numbers = #tpu.dot_dimension_numbers<[1], [0], [0], [1], [0, 0, 1, 1], [], []>} : vector<16x1024xbf16>, vector<1024x512xbf16>, vector<16x512xf32> -> vector<16x512xf32>
    %c0_9 = arith.constant 0 : index
    %c0_10 = arith.constant 0 : index
    %11 = vector.load %arg5[%c0_9, %c0_10] : memref<1x512xf32, #tpu.memory_space<vmem>>, vector<1x512xf32>
    %12 = vector.broadcast %11 : vector<1x512xf32> to vector<16x512xf32>
    %13 = arith.addf %10, %12 : vector<16x512xf32>
    %cst_11 = arith.constant 0.000000e+00 : f32
    %14 = vector.broadcast %cst_11 : f32 to vector<16x512xf32>
    %15 = arith.maximumf %13, %14 : vector<16x512xf32>
    %16 = arith.truncf %15 : vector<16x512xf32> to vector<16x512xbf16>
    %c0_12 = arith.constant 0 : index
    %c0_13 = arith.constant 0 : index
    %17 = vector.load %arg6[%c0_12, %c0_13] : memref<512x128xbf16, #tpu.memory_space<vmem>>, vector<512x128xbf16>
    %cst_14 = arith.constant dense<0.000000e+00> : vector<16x128xf32>
    %18 = tpu.matmul %16, %17, %cst_14 {dimension_numbers = #tpu.dot_dimension_numbers<[1], [0], [0], [1], [0, 0, 1, 1], [], []>} : vector<16x512xbf16>, vector<512x128xbf16>, vector<16x128xf32> -> vector<16x128xf32>
    %c0_15 = arith.constant 0 : index
    %c0_16 = arith.constant 0 : index
    %19 = vector.load %arg7[%c0_15, %c0_16] : memref<1x128xf32, #tpu.memory_space<vmem>>, vector<1x128xf32>
    %20 = vector.broadcast %19 : vector<1x128xf32> to vector<16x128xf32>
    %21 = arith.addf %18, %20 : vector<16x128xf32>
    %c0_17 = arith.constant 0 : index
    %c0_18 = arith.constant 0 : index
    %22 = vector.load %arg8[%c0_17, %c0_18] : memref<16x128xf32, #tpu.memory_space<vmem>>, vector<16x128xf32>
    tpu.vector_store %arg8[%c0_17, %c0_18], %21 {strides = array<i32>} : memref<16x128xf32, #tpu.memory_space<vmem>>, vector<16x128xf32>,
    return
  }
  func.func @transform_0(%arg0: i32) -> (i32, i32) {
    %c0_i32 = arith.constant 0 : i32
    %c0_i32_0 = arith.constant 0 : i32
    return %arg0, %c0_i32 : i32, i32
  }
  func.func @transform_1(%arg0: i32) -> (i32, i32) {
    %c0_i32 = arith.constant 0 : i32
    %c0_i32_0 = arith.constant 0 : i32
    %c0_i32_1 = arith.constant 0 : i32
    return %c0_i32, %c0_i32_0 : i32, i32
  }
  func.func @transform_2(%arg0: i32) -> (i32, i32) {
    %c0_i32 = arith.constant 0 : i32
    %c0_i32_0 = arith.constant 0 : i32
    %c0_i32_1 = arith.constant 0 : i32
    return %c0_i32, %c0_i32_0 : i32, i32
  }
  func.func @transform_3(%arg0: i32) -> (i32, i32) {
    %c0_i32 = arith.constant 0 : i32
    %c0_i32_0 = arith.constant 0 : i32
    %c0_i32_1 = arith.constant 0 : i32
    return %c0_i32, %c0_i32_0 : i32, i32
  }
  func.func @transform_4(%arg0: i32) -> (i32, i32) {
    %c0_i32 = arith.constant 0 : i32
    %c0_i32_0 = arith.constant 0 : i32
    %c0_i32_1 = arith.constant 0 : i32
    return %c0_i32, %c0_i32_0 : i32, i32
  }
  func.func @transform_5(%arg0: i32) -> (i32, i32) {
    %c0_i32 = arith.constant 0 : i32
    %c0_i32_0 = arith.constant 0 : i32
    %c0_i32_1 = arith.constant 0 : i32
    return %c0_i32, %c0_i32_0 : i32, i32
  }
  func.func @transform_6(%arg0: i32) -> (i32, i32) {
    %c0_i32 = arith.constant 0 : i32
    %c0_i32_0 = arith.constant 0 : i32
    %c0_i32_1 = arith.constant 0 : i32
    return %c0_i32, %c0_i32_0 : i32, i32
  }
  func.func @transform_7(%arg0: i32) -> (i32, i32) {
    %c0_i32 = arith.constant 0 : i32
    %c0_i32_0 = arith.constant 0 : i32
    return %arg0, %c0_i32 : i32, i32
  }
}

</mosaic_0001>

<llo_original>
// kernel: _lambda_.1
$region0: #{_lambda_.1}
  #allocation0 [shape = 'u32[]', space=smem, size = 0x4, offset = 0x4, fixed_abs, tag = 'smem constant byte address 0x4 - core index']
  #allocation1 [shape = 'u32[144,128]{1,0:T(1,128)}', space=vmem, size = 0x12000, scoped, tag = 'internal scratch']
  %s0 = inlined_call_operand.vmem [shape: bf16[64,256], index: 0, kind: input, shape index: {}]
  %s1 = inlined_call_operand.vmem [shape: bf16[256,1024], index: 1, kind: input, shape index: {}]
  %s2 = inlined_call_operand.vmem [shape: f32[1,1024], index: 2, kind: input, shape index: {}]
  %s3 = inlined_call_operand.vmem [shape: bf16[1024,512], index: 3, kind: input, shape index: {}]
  %s4 = inlined_call_operand.vmem [shape: f32[1,512], index: 4, kind: input, shape index: {}]
  %s5 = inlined_call_operand.vmem [shape: bf16[512,128], index: 5, kind: input, shape index: {}]
  %s6 = inlined_call_operand.vmem [shape: f32[1,128], index: 6, kind: input, shape index: {}]
  %s7 = inlined_call_operand.vmem [shape: f32[64,128], index: 7, kind: output, shape index: {}]
  %s8 = sld [smem:[#allocation0]]
  $region61: #{_lambda_.1} parent=0
    _
  %s10 = ssub.s32 1, %s8
  %s11 = scalar_select 0, %s10, %s8
  loop: start=0, step=1, limit=6
  $region2: #{_lambda_.1} parent=0 // loop_pre_header
    _
  $region3: #{_lambda_.1} parent=0 // loop_header
    %s13 = sphi 0, %s17
    %p14 = scmp.ge.s32.totalorder %s13, 6
    %s23 = sphi 0, %s25
    %s26 = sphi 0, %s23
    %s27 = sphi 0, %s26
    %s43 = sphi 0, %s27
    %s47 = sphi 0, %s47
    %s49 = sphi 0, %s47
    %s50 = sphi 0, %s49
    %s64 = sphi 0, %s50
    %s68 = sphi 0, %s68
    %s70 = sphi 0, %s68
    %s71 = sphi 0, %s70
    %s85 = sphi 0, %s71
    %s89 = sphi 0, %s89
    %s91 = sphi 0, %s89
    %s92 = sphi 0, %s91
    %s106 = sphi 0, %s92
    %s110 = sphi 0, %s110
    %s112 = sphi 0, %s110
    %s113 = sphi 0, %s112
    %s127 = sphi 0, %s113
    %s131 = sphi 0, %s131
    %s133 = sphi 0, %s131
    %s134 = sphi 0, %s133
    %s148 = sphi 0, %s134
    %s152 = sphi 0, %s152
    %s154 = sphi 0, %s152
    %s155 = sphi 0, %s154
    %s169 = sphi 0, %s155
    %s175 = sphi 0, %s177
    %s178 = sphi 0, %s175
    %s179 = sphi 0, %s178
    %s195 = sphi 0, %s179
  $region4: #{_lambda_.1} parent=0 // loop_header_branch
    %16 = sbr.rel (%p14) target = $region8
  $region5: #{_lambda_.1} parent=0 // loop_body
    %s18 = ssub.s32 %s13, 1
    %s19 = ssub.s32 %s13, 2
    %s20 = sadd.s32 %s13, 1
    %s21 = ssub.s32 %s13, %s20
    %p22 = scmp.eq.s32.totalorder %s21, 0
    %s24 = sadd.s32 %s23, 1
    %s25 = scalar_select %p22, %s23, %s24
    %p28 = pneg %p22
    %p29 = scmp.eq.s32.totalorder %s13, 3
    %p30 = por %p28, %p29
    %p31 = scmp.ne.s32.totalorder %s23, %s26
    %p32 = scmp.eq.s32.totalorder %s13, 0
    %p33 = por %p31, %p32
    %p34 = scmp.ne.s32.totalorder %s23, %s26
    %p35 = scmp.eq.s32.totalorder %s18, 3
    %p36 = por %p34, %p35
    %p37 = scmp.ne.s32.totalorder %s26, %s27
    %p38 = scmp.eq.s32.totalorder %s18, 0
    %p39 = por %p37, %p38
    %p40 = scmp.ne.s32.totalorder %s26, %s27
    %p41 = scmp.eq.s32.totalorder %s19, 3
    %p42 = por %p40, %p41
    %p44 = scmp.ne.s32.totalorder %s27, %s43
    %p45 = scmp.eq.s32.totalorder %s19, 0
    %p46 = por %p44, %p45
    %s48 = sadd.s32 %s47, 1
    %p51 = scmp.eq.s32.totalorder %s13, 3
    %p52 = scmp.ne.s32.totalorder %s47, %s49
    %p53 = scmp.eq.s32.totalorder %s13, 0
    %p54 = por %p52, %p53
    %p55 = scmp.ne.s32.totalorder %s47, %s49
    %p56 = scmp.eq.s32.totalorder %s18, 3
    %p57 = por %p55, %p56
    %p58 = scmp.ne.s32.totalorder %s49, %s50
    %p59 = scmp.eq.s32.totalorder %s18, 0
    %p60 = por %p58, %p59
    %p61 = scmp.ne.s32.totalorder %s49, %s50
    %p62 = scmp.eq.s32.totalorder %s19, 3
    %p63 = por %p61, %p62
    %p65 = scmp.ne.s32.totalorder %s50, %s64
    %p66 = scmp.eq.s32.totalorder %s19, 0
    %p67 = por %p65, %p66
    %s69 = sadd.s32 %s68, 1
    %p72 = scmp.eq.s32.totalorder %s13, 3
    %p73 = scmp.ne.s32.totalorder %s68, %s70
    %p74 = scmp.eq.s32.totalorder %s13, 0
    %p75 = por %p73, %p74
    %p76 = scmp.ne.s32.totalorder %s68, %s70
    %p77 = scmp.eq.s32.totalorder %s18, 3
    %p78 = por %p76, %p77
    %p79 = scmp.ne.s32.totalorder %s70, %s71
    %p80 = scmp.eq.s32.totalorder %s18, 0
    %p81 = por %p79, %p80
    %p82 = scmp.ne.s32.totalorder %s70, %s71
    %p83 = scmp.eq.s32.totalorder %s19, 3
    %p84 = por %p82, %p83
    %p86 = scmp.ne.s32.totalorder %s71, %s85
    %p87 = scmp.eq.s32.totalorder %s19, 0
    %p88 = por %p86, %p87
    %s90 = sadd.s32 %s89, 1
    %p93 = scmp.eq.s32.totalorder %s13, 3
    %p94 = scmp.ne.s32.totalorder %s89, %s91
    %p95 = scmp.eq.s32.totalorder %s13, 0
    %p96 = por %p94, %p95
    %p97 = scmp.ne.s32.totalorder %s89, %s91
    %p98 = scmp.eq.s32.totalorder %s18, 3
    %p99 = por %p97, %p98
    %p100 = scmp.ne.s32.totalorder %s91, %s92
    %p101 = scmp.eq.s32.totalorder %s18, 0
    %p102 = por %p100, %p101
    %p103 = scmp.ne.s32.totalorder %s91, %s92
    %p104 = scmp.eq.s32.totalorder %s19, 3
    %p105 = por %p103, %p104
    %p107 = scmp.ne.s32.totalorder %s92, %s106
    %p108 = scmp.eq.s32.totalorder %s19, 0
    %p109 = por %p107, %p108
    %s111 = sadd.s32 %s110, 1
    %p114 = scmp.eq.s32.totalorder %s13, 3
    %p115 = scmp.ne.s32.totalorder %s110, %s112
    %p116 = scmp.eq.s32.totalorder %s13, 0
    %p117 = por %p115, %p116
    %p118 = scmp.ne.s32.totalorder %s110, %s112
    %p119 = scmp.eq.s32.totalorder %s18, 3
    %p120 = por %p118, %p119
    %p121 = scmp.ne.s32.totalorder %s112, %s113
    %p122 = scmp.eq.s32.totalorder %s18, 0
    %p123 = por %p121, %p122
    %p124 = scmp.ne.s32.totalorder %s112, %s113
    %p125 = scmp.eq.s32.totalorder %s19, 3
    %p126 = por %p124, %p125
    %p128 = scmp.ne.s32.totalorder %s113, %s127
    %p129 = scmp.eq.s32.totalorder %s19, 0
    %p130 = por %p128, %p129
    %s132 = sadd.s32 %s131, 1
    %p135 = scmp.eq.s32.totalorder %s13, 3
    %p136 = scmp.ne.s32.totalorder %s131, %s133
    %p137 = scmp.eq.s32.totalorder %s13, 0
    %p138 = por %p136, %p137
    %p139 = scmp.ne.s32.totalorder %s131, %s133
    %p140 = scmp.eq.s32.totalorder %s18, 3
    %p141 = por %p139, %p140
    %p142 = scmp.ne.s32.totalorder %s133, %s134
    %p143 = scmp.eq.s32.totalorder %s18, 0
    %p144 = por %p142, %p143
    %p145 = scmp.ne.s32.totalorder %s133, %s134
    %p146 = scmp.eq.s32.totalorder %s19, 3
    %p147 = por %p145, %p146
    %p149 = scmp.ne.s32.totalorder %s134, %s148
    %p150 = scmp.eq.s32.totalorder %s19, 0
    %p151 = por %p149, %p150
    %s153 = sadd.s32 %s152, 1
    %p156 = scmp.eq.s32.totalorder %s13, 3
    %p157 = scmp.ne.s32.totalorder %s152, %s154
    %p158 = scmp.eq.s32.totalorder %s13, 0
    %p159 = por %p157, %p158
    %p160 = scmp.ne.s32.totalorder %s152, %s154
    %p161 = scmp.eq.s32.totalorder %s18, 3
    %p162 = por %p160, %p161
    %p163 = scmp.ne.s32.totalorder %s154, %s155
    %p164 = scmp.eq.s32.totalorder %s18, 0
    %p165 = por %p163, %p164
    %p166 = scmp.ne.s32.totalorder %s154, %s155
    %p167 = scmp.eq.s32.totalorder %s19, 3
    %p168 = por %p166, %p167
    %p170 = scmp.ne.s32.totalorder %s155, %s169
    %p171 = scmp.eq.s32.totalorder %s19, 0
    %p172 = por %p170, %p171
    %s173 = ssub.s32 %s13, %s20
    %p174 = scmp.eq.s32.totalorder %s173, 0
    %s176 = sadd.s32 %s175, 1
    %s177 = scalar_select %p174, %s175, %s176
    %p180 = pneg %p174
    %p181 = scmp.eq.s32.totalorder %s13, 3
    %p182 = por %p180, %p181
    %p183 = scmp.ne.s32.totalorder %s175, %s178
    %p184 = scmp.eq.s32.totalorder %s13, 0
    %p185 = por %p183, %p184
    %p186 = scmp.ne.s32.totalorder %s175, %s178
    %p187 = scmp.eq.s32.totalorder %s18, 3
    %p188 = por %p186, %p187
    %p189 = scmp.ne.s32.totalorder %s178, %s179
    %p190 = scmp.eq.s32.totalorder %s18, 0
    %p191 = por %p189, %p190
    %p192 = scmp.ne.s32.totalorder %s178, %s179
    %p193 = scmp.eq.s32.totalorder %s19, 3
    %p194 = por %p192, %p193
    %p196 = scmp.ne.s32.totalorder %s179, %s195
    %p197 = scmp.eq.s32.totalorder %s19, 0
    %p198 = por %p196, %p197
    %p199 = scmp.le.s32.totalorder 1, %s13
    %p200 = scmp.lt.s32.totalorder %s13, 5
    %p201 = pnand %p199, %p200
    %p202 = pneg %p201
    // Predicated region
    $region9: #{_lambda_.1} parent=5 // pred_check
      _
    $region10: #{_lambda_.1} parent=5 // pred_check_branch
      %204 = sbr.rel (%p201) target = $region12
    $region11: #{_lambda_.1} parent=5 // pred_region
      %s205 = ssub.s32 %s13, 1
      // Predicated region
      $region13: #{_lambda_.1} parent=11 // pred_check
        %p206 = pneg %p60
      $region14: #{_lambda_.1} parent=11 // pred_check_branch
        %208 = sbr.rel (%p206) target = $region16
      $region15: #{_lambda_.1} parent=11 // pred_region
        _
      $region16: #{_lambda_.1} parent=11 // pred_fallthru
        _
      // Predicated region
      $region17: #{_lambda_.1} parent=11 // pred_check
        %p209 = pneg %p81
      $region18: #{_lambda_.1} parent=11 // pred_check_branch
        %211 = sbr.rel (%p209) target = $region20
      $region19: #{_lambda_.1} parent=11 // pred_region
        _
      $region20: #{_lambda_.1} parent=11 // pred_fallthru
        _
      // Predicated region
      $region21: #{_lambda_.1} parent=11 // pred_check
        %p212 = pneg %p102
      $region22: #{_lambda_.1} parent=11 // pred_check_branch
        %214 = sbr.rel (%p212) target = $region24
      $region23: #{_lambda_.1} parent=11 // pred_region
        _
      $region24: #{_lambda_.1} parent=11 // pred_fallthru
        _
      // Predicated region
      $region25: #{_lambda_.1} parent=11 // pred_check
        %p215 = pneg %p123
      $region26: #{_lambda_.1} parent=11 // pred_check_branch
        %217 = sbr.rel (%p215) target = $region28
      $region27: #{_lambda_.1} parent=11 // pred_region
        _
      $region28: #{_lambda_.1} parent=11 // pred_fallthru
        _
      // Predicated region
      $region29: #{_lambda_.1} parent=11 // pred_check
        %p218 = pneg %p144
      $region30: #{_lambda_.1} parent=11 // pred_check_branch
        %220 = sbr.rel (%p218) target = $region32
      $region31: #{_lambda_.1} parent=11 // pred_region
        _
      $region32: #{_lambda_.1} parent=11 // pred_fallthru
        _
      // Predicated region
      $region33: #{_lambda_.1} parent=11 // pred_check
        %p221 = pneg %p165
      $region34: #{_lambda_.1} parent=11 // pred_check_branch
        %223 = sbr.rel (%p221) target = $region36
      $region35: #{_lambda_.1} parent=11 // pred_region
        _
      $region36: #{_lambda_.1} parent=11 // pred_fallthru
        _
    $region12: #{_lambda_.1} parent=5 // pred_fallthru
      _
    %p224 = scmp.lt.s32.totalorder %s13, 4
    // Predicated region
    $region37: #{_lambda_.1} parent=5 // pred_check
      %p225 = pneg %p224
    $region38: #{_lambda_.1} parent=5 // pred_check_branch
      %227 = sbr.rel (%p225) target = $region40
    $region39: #{_lambda_.1} parent=5 // pred_region
      // Predicated region
      $region41: #{_lambda_.1} parent=39 // pred_check
        %p228 = pneg %p33
      $region42: #{_lambda_.1} parent=39 // pred_check_branch
        %230 = sbr.rel (%p228) target = $region44
      $region43: #{_lambda_.1} parent=39 // pred_region
        %s231 = smul.u32 2, %s13
        %p232 = scmp.lt.s32.totalorder %s231, 7
        %s233 = scalar_select %p232, %s231, 7
        %s234 = smul.addr %s233, 2
        %s235 = smul.addr %s234, 4
        %s236 = scalar_lea.vmem %s0, %s235
        %s237 = smul.u32 2, %s13
      $region44: #{_lambda_.1} parent=39 // pred_fallthru
        _
    $region40: #{_lambda_.1} parent=5 // pred_fallthru
      _
    %p238 = scmp.le.s32.totalorder 1, %s13
    %p239 = scmp.lt.s32.totalorder %s13, 5
    %p240 = pnand %p238, %p239
    %p241 = pneg %p240
    // Predicated region
    $region45: #{_lambda_.1} parent=5 // pred_check
      _
    $region46: #{_lambda_.1} parent=5 // pred_check_branch
      %243 = sbr.rel (%p240) target = $region48
    $region47: #{_lambda_.1} parent=5 // pred_region
      %s244 = ssub.s32 %s13, 1
      %s245 = smul.u32 2, %s18
      %p246 = scmp.lt.s32.totalorder %s245, 7
      %s247 = scalar_select %p246, %s245, 7
      %s248 = smul.addr %s247, 2
      %s249 = smul.addr %s248, 4
      %s250 = scalar_lea.vmem %s0, %s249
      %p251 = pneg %p39
      %p252 = pneg %p36
      %p253 = pneg %p60
      %p254 = pneg %p57
      %p255 = pneg %p81
      %p256 = pneg %p78
      %p257 = pneg %p102
      %p258 = pneg %p99
      %p259 = pneg %p123
      %p260 = pneg %p120
      %p261 = pneg %p144
      %p262 = pneg %p141
      %p263 = pneg %p165
      %p264 = pneg %p162
      %p265 = pneg %p191
      %p266 = pneg %p188
      %s267 = smul.u32 2, %s18
      %p268 = scmp.lt.s32.totalorder %s267, 7
      %s269 = scalar_select %p268, %s267, 7
      %s270 = smul.addr %s269, 8
      %s271 = scalar_lea.vmem %s7, %s270
      %s272 = smul.u32 2, %s18
      %p273 = scmp.lt.s32.totalorder %s272, 7
      %s274 = scalar_select %p273, %s272, 7
      %s275 = smul.addr %s274, 2
      %s276 = smul.addr %s275, 4
      %s277 = scalar_lea.vmem %s0, %s276
      %s278 = smul.u32 2, %s18
      %s279 = smul.u32 2, %s18
      %p280 = scmp.lt.s32.totalorder %s279, 7
      %s281 = scalar_select %p280, %s279, 7
      %s282 = smul.addr %s281, 8
      %s283 = scalar_lea.vmem %s7, %s282
      %s284 = smul.u32 2, %s18
      %v286 = vld [vmem:[%s277] sm:$0xff]
      %v287 = vld [vmem:[%s277 + $0x8] sm:$0xff]
      %v288 = vld [vmem:[%s1] sm:$0xff]
      %v289 = vld [vmem:[%s1 + $0x8] sm:$0xff]
      %v290 = vld [vmem:[%s1 + $0x10] sm:$0xff]
      %v291 = vld [vmem:[%s1 + $0x18] sm:$0xff]
      %v292 = vld [vmem:[%s1 + $0x20] sm:$0xff]
      %v293 = vld [vmem:[%s1 + $0x28] sm:$0xff]
      %v294 = vld [vmem:[%s1 + $0x30] sm:$0xff]
      %v295 = vld [vmem:[%s1 + $0x38] sm:$0xff]
      %v296 = vld [vmem:[%s1 + $0x40] sm:$0xff]
      %v297 = vld [vmem:[%s1 + $0x48] sm:$0xff]
      %v298 = vld [vmem:[%s1 + $0x50] sm:$0xff]
      %v299 = vld [vmem:[%s1 + $0x58] sm:$0xff]
      %v300 = vld [vmem:[%s1 + $0x60] sm:$0xff]
      %v301 = vld [vmem:[%s1 + $0x68] sm:$0xff]
      %v302 = vld [vmem:[%s1 + $0x70] sm:$0xff]
      %v303 = vld [vmem:[%s1 + $0x78] sm:$0xff]
      %v304 = vld [vmem:[%s1 + $0x80] sm:$0xff]
      %v305 = vld [vmem:[%s1 + $0x88] sm:$0xff]
      %v306 = vld [vmem:[%s1 + $0x90] sm:$0xff]
      %v307 = vld [vmem:[%s1 + $0x98] sm:$0xff]
      %v308 = vld [vmem:[%s1 + $0xa0] sm:$0xff]
      %v309 = vld [vmem:[%s1 + $0xa8] sm:$0xff]
      %v310 = vld [vmem:[%s1 + $0xb0] sm:$0xff]
      %v311 = vld [vmem:[%s1 + $0xb8] sm:$0xff]
      %v312 = vld [vmem:[%s1 + $0xc0] sm:$0xff]
      %v313 = vld [vmem:[%s1 + $0xc8] sm:$0xff]
      %v314 = vld [vmem:[%s1 + $0xd0] sm:$0xff]
      %v315 = vld [vmem:[%s1 + $0xd8] sm:$0xff]
      %v316 = vld [vmem:[%s1 + $0xe0] sm:$0xff]
      %v317 = vld [vmem:[%s1 + $0xe8] sm:$0xff]
      %v318 = vld [vmem:[%s1 + $0xf0] sm:$0xff]
      %v319 = vld [vmem:[%s1 + $0xf8] sm:$0xff]
      %v320 = vld [vmem:[%s1 + $0x100] sm:$0xff]
      %v321 = vld [vmem:[%s1 + $0x108] sm:$0xff]
      %v322 = vld [vmem:[%s1 + $0x110] sm:$0xff]
      %v323 = vld [vmem:[%s1 + $0x118] sm:$0xff]
      %v324 = vld [vmem:[%s1 + $0x120] sm:$0xff]
      %v325 = vld [vmem:[%s1 + $0x128] sm:$0xff]
      %v326 = vld [vmem:[%s1 + $0x130] sm:$0xff]
      %v327 = vld [vmem:[%s1 + $0x138] sm:$0xff]
      %v328 = vld [vmem:[%s1 + $0x140] sm:$0xff]
      %v329 = vld [vmem:[%s1 + $0x148] sm:$0xff]
      %v330 = vld [vmem:[%s1 + $0x150] sm:$0xff]
      %v331 = vld [vmem:[%s1 + $0x158] sm:$0xff]
      %v332 = vld [vmem:[%s1 + $0x160] sm:$0xff]
      %v333 = vld [vmem:[%s1 + $0x168] sm:$0xff]
      %v334 = vld [vmem:[%s1 + $0x170] sm:$0xff]
      %v335 = vld [vmem:[%s1 + $0x178] sm:$0xff]
      %v336 = vld [vmem:[%s1 + $0x180] sm:$0xff]
      %v337 = vld [vmem:[%s1 + $0x188] sm:$0xff]
      %v338 = vld [vmem:[%s1 + $0x190] sm:$0xff]
      %v339 = vld [vmem:[%s1 + $0x198] sm:$0xff]
      %v340 = vld [vmem:[%s1 + $0x1a0] sm:$0xff]
      %v341 = vld [vmem:[%s1 + $0x1a8] sm:$0xff]
      %v342 = vld [vmem:[%s1 + $0x1b0] sm:$0xff]
      %v343 = vld [vmem:[%s1 + $0x1b8] sm:$0xff]
      %v344 = vld [vmem:[%s1 + $0x1c0] sm:$0xff]
      %v345 = vld [vmem:[%s1 + $0x1c8] sm:$0xff]
      %v346 = vld [vmem:[%s1 + $0x1d0] sm:$0xff]
      %v347 = vld [vmem:[%s1 + $0x1d8] sm:$0xff]
      %v348 = vld [vmem:[%s1 + $0x1e0] sm:$0xff]
      %v349 = vld [vmem:[%s1 + $0x1e8] sm:$0xff]
      %v350 = vld [vmem:[%s1 + $0x1f0] sm:$0xff]
      %v351 = vld [vmem:[%s1 + $0x1f8] sm:$0xff]
      %v352 = vld [vmem:[%s1 + $0x200] sm:$0xff]
      %v353 = vld [vmem:[%s1 + $0x208] sm:$0xff]
      %v354 = vld [vmem:[%s1 + $0x210] sm:$0xff]
      %v355 = vld [vmem:[%s1 + $0x218] sm:$0xff]
      %v356 = vld [vmem:[%s1 + $0x220] sm:$0xff]
      %v357 = vld [vmem:[%s1 + $0x228] sm:$0xff]
      %v358 = vld [vmem:[%s1 + $0x230] sm:$0xff]
      %v359 = vld [vmem:[%s1 + $0x238] sm:$0xff]
      %v360 = vld [vmem:[%s1 + $0x240] sm:$0xff]
      %v361 = vld [vmem:[%s1 + $0x248] sm:$0xff]
      %v362 = vld [vmem:[%s1 + $0x250] sm:$0xff]
      %v363 = vld [vmem:[%s1 + $0x258] sm:$0xff]
      %v364 = vld [vmem:[%s1 + $0x260] sm:$0xff]
      %v365 = vld [vmem:[%s1 + $0x268] sm:$0xff]
      %v366 = vld [vmem:[%s1 + $0x270] sm:$0xff]
      %v367 = vld [vmem:[%s1 + $0x278] sm:$0xff]
      %v368 = vld [vmem:[%s1 + $0x280] sm:$0xff]
      %v369 = vld [vmem:[%s1 + $0x288] sm:$0xff]
      %v370 = vld [vmem:[%s1 + $0x290] sm:$0xff]
      %v371 = vld [vmem:[%s1 + $0x298] sm:$0xff]
      %v372 = vld [vmem:[%s1 + $0x2a0] sm:$0xff]
      %v373 = vld [vmem:[%s1 + $0x2a8] sm:$0xff]
      %v374 = vld [vmem:[%s1 + $0x2b0] sm:$0xff]
      %v375 = vld [vmem:[%s1 + $0x2b8] sm:$0xff]
      %v376 = vld [vmem:[%s1 + $0x2c0] sm:$0xff]
      %v377 = vld [vmem:[%s1 + $0x2c8] sm:$0xff]
      %v378 = vld [vmem:[%s1 + $0x2d0] sm:$0xff]
      %v379 = vld [vmem:[%s1 + $0x2d8] sm:$0xff]
      %v380 = vld [vmem:[%s1 + $0x2e0] sm:$0xff]
      %v381 = vld [vmem:[%s1 + $0x2e8] sm:$0xff]
      %v382 = vld [vmem:[%s1 + $0x2f0] sm:$0xff]
      %v383 = vld [vmem:[%s1 + $0x2f8] sm:$0xff]
      %v384 = vld [vmem:[%s1 + $0x300] sm:$0xff]
      %v385 = vld [vmem:[%s1 + $0x308] sm:$0xff]
      %v386 = vld [vmem:[%s1 + $0x310] sm:$0xff]
      %v387 = vld [vmem:[%s1 + $0x318] sm:$0xff]
      %v388 = vld [vmem:[%s1 + $0x320] sm:$0xff]
      %v389 = vld [vmem:[%s1 + $0x328] sm:$0xff]
      %v390 = vld [vmem:[%s1 + $0x330] sm:$0xff]
      %v391 = vld [vmem:[%s1 + $0x338] sm:$0xff]
      %v392 = vld [vmem:[%s1 + $0x340] sm:$0xff]
      %v393 = vld [vmem:[%s1 + $0x348] sm:$0xff]
      %v394 = vld [vmem:[%s1 + $0x350] sm:$0xff]
      %v395 = vld [vmem:[%s1 + $0x358] sm:$0xff]
      %v396 = vld [vmem:[%s1 + $0x360] sm:$0xff]
      %v397 = vld [vmem:[%s1 + $0x368] sm:$0xff]
      %v398 = vld [vmem:[%s1 + $0x370] sm:$0xff]
      %v399 = vld [vmem:[%s1 + $0x378] sm:$0xff]
      %v400 = vld [vmem:[%s1 + $0x380] sm:$0xff]
      %v401 = vld [vmem:[%s1 + $0x388] sm:$0xff]
      %v402 = vld [vmem:[%s1 + $0x390] sm:$0xff]
      %v403 = vld [vmem:[%s1 + $0x398] sm:$0xff]
      %v404 = vld [vmem:[%s1 + $0x3a0] sm:$0xff]
      %v405 = vld [vmem:[%s1 + $0x3a8] sm:$0xff]
      %v406 = vld [vmem:[%s1 + $0x3b0] sm:$0xff]
      %v407 = vld [vmem:[%s1 + $0x3b8] sm:$0xff]
      %v408 = vld [vmem:[%s1 + $0x3c0] sm:$0xff]
      %v409 = vld [vmem:[%s1 + $0x3c8] sm:$0xff]
      %v410 = vld [vmem:[%s1 + $0x3d0] sm:$0xff]
      %v411 = vld [vmem:[%s1 + $0x3d8] sm:$0xff]
      %v412 = vld [vmem:[%s1 + $0x3e0] sm:$0xff]
      %v413 = vld [vmem:[%s1 + $0x3e8] sm:$0xff]
      %v414 = vld [vmem:[%s1 + $0x3f0] sm:$0xff]
      %v415 = vld [vmem:[%s1 + $0x3f8] sm:$0xff]
      %v416 = vld [vmem:[%s2] sm:$0xff]
      %v418 = vlaneseq
      %v419 = vshrl.u32 %v418, 7
      %v420 = vsub.s32 0, %v419
      %v421 = vrot.slane %v416, %v420
      %v422 = vlaneseq
      %v423 = vshrl.u32 %v422, 7
      %v424 = vsub.s32 1, %v423
      %v425 = vrot.slane %v416, %v424
      %v426 = vlaneseq
      %v427 = vshrl.u32 %v426, 7
      %v428 = vsub.s32 2, %v427
      %v429 = vrot.slane %v416, %v428
      %v430 = vlaneseq
      %v431 = vshrl.u32 %v430, 7
      %v432 = vsub.s32 3, %v431
      %v433 = vrot.slane %v416, %v432
      %v434 = vlaneseq
      %v435 = vshrl.u32 %v434, 7
      %v436 = vsub.s32 4, %v435
      %v437 = vrot.slane %v416, %v436
      %v438 = vlaneseq
      %v439 = vshrl.u32 %v438, 7
      %v440 = vsub.s32 5, %v439
      %v441 = vrot.slane %v416, %v440
      %v442 = vlaneseq
      %v443 = vshrl.u32 %v442, 7
      %v444 = vsub.s32 6, %v443
      %v445 = vrot.slane %v416, %v444
      %v446 = vlaneseq
      %v447 = vshrl.u32 %v446, 7
      %v448 = vsub.s32 7, %v447
      %v449 = vrot.slane %v416, %v448
      %v460 = vunpack.c.l.b16 %v286
      %v461 = vunpack.c.h.b16 %v286
      %v462 = vunpack.c.l.b16 %v287
      %v463 = vunpack.c.h.b16 %v287
      %v464 = vpack.c.b16 %v462, %v460
      %v465 = vpack.c.b16 %v463, %v461
      %v596 = vunpack.c.l.b16 %v288
      %v597 = vunpack.c.h.b16 %v288
      %v598 = vunpack.c.l.b16 %v289
      %v599 = vunpack.c.h.b16 %v289
      %v600 = vunpack.c.l.b16 %v290
      %v601 = vunpack.c.h.b16 %v290
      %v602 = vunpack.c.l.b16 %v291
      %v603 = vunpack.c.h.b16 %v291
      %v604 = vunpack.c.l.b16 %v292
      %v605 = vunpack.c.h.b16 %v292
      %v606 = vunpack.c.l.b16 %v293
      %v607 = vunpack.c.h.b16 %v293
      %v608 = vunpack.c.l.b16 %v294
      %v609 = vunpack.c.h.b16 %v294
      %v610 = vunpack.c.l.b16 %v295
      %v611 = vunpack.c.h.b16 %v295
      %v612 = vunpack.c.l.b16 %v296
      %v613 = vunpack.c.h.b16 %v296
      %v614 = vunpack.c.l.b16 %v297
      %v615 = vunpack.c.h.b16 %v297
      %v616 = vunpack.c.l.b16 %v298
      %v617 = vunpack.c.h.b16 %v298
      %v618 = vunpack.c.l.b16 %v299
      %v619 = vunpack.c.h.b16 %v299
      %v620 = vunpack.c.l.b16 %v300
      %v621 = vunpack.c.h.b16 %v300
      %v622 = vunpack.c.l.b16 %v301
      %v623 = vunpack.c.h.b16 %v301
      %v624 = vunpack.c.l.b16 %v302
      %v625 = vunpack.c.h.b16 %v302
      %v626 = vunpack.c.l.b16 %v303
      %v627 = vunpack.c.h.b16 %v303
      %v628 = vunpack.c.l.b16 %v304
      %v629 = vunpack.c.h.b16 %v304
      %v630 = vunpack.c.l.b16 %v305
      %v631 = vunpack.c.h.b16 %v305
      %v632 = vunpack.c.l.b16 %v306
      %v633 = vunpack.c.h.b16 %v306
      %v634 = vunpack.c.l.b16 %v307
      %v635 = vunpack.c.h.b16 %v307
      %v636 = vunpack.c.l.b16 %v308
      %v637 = vunpack.c.h.b16 %v308
      %v638 = vunpack.c.l.b16 %v309
      %v639 = vunpack.c.h.b16 %v309
      %v640 = vunpack.c.l.b16 %v310
      %v641 = vunpack.c.h.b16 %v310
      %v642 = vunpack.c.l.b16 %v311
      %v643 = vunpack.c.h.b16 %v311
      %v644 = vunpack.c.l.b16 %v312
      %v645 = vunpack.c.h.b16 %v312
      %v646 = vunpack.c.l.b16 %v313
      %v647 = vunpack.c.h.b16 %v313
      %v648 = vunpack.c.l.b16 %v314
      %v649 = vunpack.c.h.b16 %v314
      %v650 = vunpack.c.l.b16 %v315
      %v651 = vunpack.c.h.b16 %v315
      %v652 = vunpack.c.l.b16 %v316
      %v653 = vunpack.c.h.b16 %v316
      %v654 = vunpack.c.l.b16 %v317
      %v655 = vunpack.c.h.b16 %v317
      %v656 = vunpack.c.l.b16 %v318
      %v657 = vunpack.c.h.b16 %v318
      %v658 = vunpack.c.l.b16 %v319
      %v659 = vunpack.c.h.b16 %v319
      %v660 = vunpack.c.l.b16 %v320
      %v661 = vunpack.c.h.b16 %v320
      %v662 = vunpack.c.l.b16 %v321
      %v663 = vunpack.c.h.b16 %v321
      %v664 = vunpack.c.l.b16 %v322
      %v665 = vunpack.c.h.b16 %v322
      %v666 = vunpack.c.l.b16 %v323
      %v667 = vunpack.c.h.b16 %v323
      %v668 = vunpack.c.l.b16 %v324
      %v669 = vunpack.c.h.b16 %v324
      %v670 = vunpack.c.l.b16 %v325
      %v671 = vunpack.c.h.b16 %v325
      %v672 = vunpack.c.l.b16 %v326
      %v673 = vunpack.c.h.b16 %v326
      %v674 = vunpack.c.l.b16 %v327
      %v675 = vunpack.c.h.b16 %v327
      %v676 = vunpack.c.l.b16 %v328
      %v677 = vunpack.c.h.b16 %v328
      %v678 = vunpack.c.l.b16 %v329
      %v679 = vunpack.c.h.b16 %v329
      %v680 = vunpack.c.l.b16 %v330
      %v681 = vunpack.c.h.b16 %v330
      %v682 = vunpack.c.l.b16 %v331
      %v683 = vunpack.c.h.b16 %v331
      %v684 = vunpack.c.l.b16 %v332
      %v685 = vunpack.c.h.b16 %v332
      %v686 = vunpack.c.l.b16 %v333
      %v687 = vunpack.c.h.b16 %v333
      %v688 = vunpack.c.l.b16 %v334
      %v689 = vunpack.c.h.b16 %v334
      %v690 = vunpack.c.l.b16 %v335
      %v691 = vunpack.c.h.b16 %v335
      %v692 = vunpack.c.l.b16 %v336
      %v693 = vunpack.c.h.b16 %v336
      %v694 = vunpack.c.l.b16 %v337
      %v695 = vunpack.c.h.b16 %v337
      %v696 = vunpack.c.l.b16 %v338
      %v697 = vunpack.c.h.b16 %v338
      %v698 = vunpack.c.l.b16 %v339
      %v699 = vunpack.c.h.b16 %v339
      %v700 = vunpack.c.l.b16 %v340
      %v701 = vunpack.c.h.b16 %v340
      %v702 = vunpack.c.l.b16 %v341
      %v703 = vunpack.c.h.b16 %v341
      %v704 = vunpack.c.l.b16 %v342
      %v705 = vunpack.c.h.b16 %v342
      %v706 = vunpack.c.l.b16 %v343
      %v707 = vunpack.c.h.b16 %v343
      %v708 = vunpack.c.l.b16 %v344
      %v709 = vunpack.c.h.b16 %v344
      %v710 = vunpack.c.l.b16 %v345
      %v711 = vunpack.c.h.b16 %v345
      %v712 = vunpack.c.l.b16 %v346
      %v713 = vunpack.c.h.b16 %v346
      %v714 = vunpack.c.l.b16 %v347
      %v715 = vunpack.c.h.b16 %v347
      %v716 = vunpack.c.l.b16 %v348
      %v717 = vunpack.c.h.b16 %v348
      %v718 = vunpack.c.l.b16 %v349
      %v719 = vunpack.c.h.b16 %v349
      %v720 = vunpack.c.l.b16 %v350
      %v721 = vunpack.c.h.b16 %v350
      %v722 = vunpack.c.l.b16 %v351
      %v723 = vunpack.c.h.b16 %v351
      %v724 = vunpack.c.l.b16 %v352
      %v725 = vunpack.c.h.b16 %v352
      %v726 = vunpack.c.l.b16 %v353
      %v727 = vunpack.c.h.b16 %v353
      %v728 = vunpack.c.l.b16 %v354
      %v729 = vunpack.c.h.b16 %v354
      %v730 = vunpack.c.l.b16 %v355
      %v731 = vunpack.c.h.b16 %v355
      %v732 = vunpack.c.l.b16 %v356
      %v733 = vunpack.c.h.b16 %v356
      %v734 = vunpack.c.l.b16 %v357
      %v735 = vunpack.c.h.b16 %v357
      %v736 = vunpack.c.l.b16 %v358
      %v737 = vunpack.c.h.b16 %v358
      %v738 = vunpack.c.l.b16 %v359
      %v739 = vunpack.c.h.b16 %v359
      %v740 = vunpack.c.l.b16 %v360
      %v741 = vunpack.c.h.b16 %v360
      %v742 = vunpack.c.l.b16 %v361
      %v743 = vunpack.c.h.b16 %v361
      %v744 = vunpack.c.l.b16 %v362
      %v745 = vunpack.c.h.b16 %v362
      %v746 = vunpack.c.l.b16 %v363
      %v747 = vunpack.c.h.b16 %v363
      %v748 = vunpack.c.l.b16 %v364
      %v749 = vunpack.c.h.b16 %v364
      %v750 = vunpack.c.l.b16 %v365
      %v751 = vunpack.c.h.b16 %v365
      %v752 = vunpack.c.l.b16 %v366
      %v753 = vunpack.c.h.b16 %v366
      %v754 = vunpack.c.l.b16 %v367
      %v755 = vunpack.c.h.b16 %v367
      %v756 = vunpack.c.l.b16 %v368
      %v757 = vunpack.c.h.b16 %v368
      %v758 = vunpack.c.l.b16 %v369
      %v759 = vunpack.c.h.b16 %v369
      %v760 = vunpack.c.l.b16 %v370
      %v761 = vunpack.c.h.b16 %v370
      %v762 = vunpack.c.l.b16 %v371
      %v763 = vunpack.c.h.b16 %v371
      %v764 = vunpack.c.l.b16 %v372
      %v765 = vunpack.c.h.b16 %v372
      %v766 = vunpack.c.l.b16 %v373
      %v767 = vunpack.c.h.b16 %v373
      %v768 = vunpack.c.l.b16 %v374
      %v769 = vunpack.c.h.b16 %v374
      %v770 = vunpack.c.l.b16 %v375
      %v771 = vunpack.c.h.b16 %v375
      %v772 = vunpack.c.l.b16 %v376
      %v773 = vunpack.c.h.b16 %v376
      %v774 = vunpack.c.l.b16 %v377
      %v775 = vunpack.c.h.b16 %v377
      %v776 = vunpack.c.l.b16 %v378
      %v777 = vunpack.c.h.b16 %v378
      %v778 = vunpack.c.l.b16 %v379
      %v779 = vunpack.c.h.b16 %v379
      %v780 = vunpack.c.l.b16 %v380
      %v781 = vunpack.c.h.b16 %v380
      %v782 = vunpack.c.l.b16 %v381
      %v783 = vunpack.c.h.b16 %v381
      %v784 = vunpack.c.l.b16 %v382
      %v785 = vunpack.c.h.b16 %v382
      %v786 = vunpack.c.l.b16 %v383
      %v787 = vunpack.c.h.b16 %v383
      %v788 = vunpack.c.l.b16 %v384
      %v789 = vunpack.c.h.b16 %v384
      %v790 = vunpack.c.l.b16 %v385
      %v791 = vunpack.c.h.b16 %v385
      %v792 = vunpack.c.l.b16 %v386
      %v793 = vunpack.c.h.b16 %v386
      %v794 = vunpack.c.l.b16 %v387
      %v795 = vunpack.c.h.b16 %v387
      %v796 = vunpack.c.l.b16 %v388
      %v797 = vunpack.c.h.b16 %v388
      %v798 = vunpack.c.l.b16 %v389
      %v799 = vunpack.c.h.b16 %v389
      %v800 = vunpack.c.l.b16 %v390
      %v801 = vunpack.c.h.b16 %v390
      %v802 = vunpack.c.l.b16 %v391
      %v803 = vunpack.c.h.b16 %v391
      %v804 = vunpack.c.l.b16 %v392
      %v805 = vunpack.c.h.b16 %v392
      %v806 = vunpack.c.l.b16 %v393
      %v807 = vunpack.c.h.b16 %v393
      %v808 = vunpack.c.l.b16 %v394
      %v809 = vunpack.c.h.b16 %v394
      %v810 = vunpack.c.l.b16 %v395
      %v811 = vunpack.c.h.b16 %v395
      %v812 = vunpack.c.l.b16 %v396
      %v813 = vunpack.c.h.b16 %v396
      %v814 = vunpack.c.l.b16 %v397
      %v815 = vunpack.c.h.b16 %v397
      %v816 = vunpack.c.l.b16 %v398
      %v817 = vunpack.c.h.b16 %v398
      %v818 = vunpack.c.l.b16 %v399
      %v819 = vunpack.c.h.b16 %v399
      %v820 = vunpack.c.l.b16 %v400
      %v821 = vunpack.c.h.b16 %v400
      %v822 = vunpack.c.l.b16 %v401
      %v823 = vunpack.c.h.b16 %v401
      %v824 = vunpack.c.l.b16 %v402
      %v825 = vunpack.c.h.b16 %v402
      %v826 = vunpack.c.l.b16 %v403
      %v827 = vunpack.c.h.b16 %v403
      %v828 = vunpack.c.l.b16 %v404
      %v829 = vunpack.c.h.b16 %v404
      %v830 = vunpack.c.l.b16 %v405
      %v831 = vunpack.c.h.b16 %v405
      %v832 = vunpack.c.l.b16 %v406
      %v833 = vunpack.c.h.b16 %v406
      %v834 = vunpack.c.l.b16 %v407
      %v835 = vunpack.c.h.b16 %v407
      %v836 = vunpack.c.l.b16 %v408
      %v837 = vunpack.c.h.b16 %v408
      %v838 = vunpack.c.l.b16 %v409
      %v839 = vunpack.c.h.b16 %v409
      %v840 = vunpack.c.l.b16 %v410
      %v841 = vunpack.c.h.b16 %v410
      %v842 = vunpack.c.l.b16 %v411
      %v843 = vunpack.c.h.b16 %v411
      %v844 = vunpack.c.l.b16 %v412
      %v845 = vunpack.c.h.b16 %v412
      %v846 = vunpack.c.l.b16 %v413
      %v847 = vunpack.c.h.b16 %v413
      %v848 = vunpack.c.l.b16 %v414
      %v849 = vunpack.c.h.b16 %v414
      %v850 = vunpack.c.l.b16 %v415
      %v851 = vunpack.c.h.b16 %v415
      %v852 = vpack.c.b16 %v604, %v596
      %v853 = vpack.c.b16 %v605, %v597
      %v854 = vpack.c.b16 %v606, %v598
      %v855 = vpack.c.b16 %v607, %v599
      %v856 = vpack.c.b16 %v608, %v600
      %v857 = vpack.c.b16 %v609, %v601
      %v858 = vpack.c.b16 %v610, %v602
      %v859 = vpack.c.b16 %v611, %v603
      %v860 = vpack.c.b16 %v620, %v612
      %v861 = vpack.c.b16 %v621, %v613
      %v862 = vpack.c.b16 %v622, %v614
      %v863 = vpack.c.b16 %v623, %v615
      %v864 = vpack.c.b16 %v624, %v616
      %v865 = vpack.c.b16 %v625, %v617
      %v866 = vpack.c.b16 %v626, %v618
      %v867 = vpack.c.b16 %v627, %v619
      %v868 = vpack.c.b16 %v636, %v628
      %v869 = vpack.c.b16 %v637, %v629
      %v870 = vpack.c.b16 %v638, %v630
      %v871 = vpack.c.b16 %v639, %v631
      %v872 = vpack.c.b16 %v640, %v632
      %v873 = vpack.c.b16 %v641, %v633
      %v874 = vpack.c.b16 %v642, %v634
      %v875 = vpack.c.b16 %v643, %v635
      %v876 = vpack.c.b16 %v652, %v644
      %v877 = vpack.c.b16 %v653, %v645
      %v878 = vpack.c.b16 %v654, %v646
      %v879 = vpack.c.b16 %v655, %v647
      %v880 = vpack.c.b16 %v656, %v648
      %v881 = vpack.c.b16 %v657, %v649
      %v882 = vpack.c.b16 %v658, %v650
      %v883 = vpack.c.b16 %v659, %v651
      %v884 = vpack.c.b16 %v668, %v660
      %v885 = vpack.c.b16 %v669, %v661
      %v886 = vpack.c.b16 %v670, %v662
      %v887 = vpack.c.b16 %v671, %v663
      %v888 = vpack.c.b16 %v672, %v664
      %v889 = vpack.c.b16 %v673, %v665
      %v890 = vpack.c.b16 %v674, %v666
      %v891 = vpack.c.b16 %v675, %v667
      %v892 = vpack.c.b16 %v684, %v676
      %v893 = vpack.c.b16 %v685, %v677
      %v894 = vpack.c.b16 %v686, %v678
      %v895 = vpack.c.b16 %v687, %v679
      %v896 = vpack.c.b16 %v688, %v680
      %v897 = vpack.c.b16 %v689, %v681
      %v898 = vpack.c.b16 %v690, %v682
      %v899 = vpack.c.b16 %v691, %v683
      %v900 = vpack.c.b16 %v700, %v692
      %v901 = vpack.c.b16 %v701, %v693
      %v902 = vpack.c.b16 %v702, %v694
      %v903 = vpack.c.b16 %v703, %v695
      %v904 = vpack.c.b16 %v704, %v696
      %v905 = vpack.c.b16 %v705, %v697
      %v906 = vpack.c.b16 %v706, %v698
      %v907 = vpack.c.b16 %v707, %v699
      %v908 = vpack.c.b16 %v716, %v708
      %v909 = vpack.c.b16 %v717, %v709
      %v910 = vpack.c.b16 %v718, %v710
      %v911 = vpack.c.b16 %v719, %v711
      %v912 = vpack.c.b16 %v720, %v712
      %v913 = vpack.c.b16 %v721, %v713
      %v914 = vpack.c.b16 %v722, %v714
      %v915 = vpack.c.b16 %v723, %v715
      %v916 = vpack.c.b16 %v732, %v724
      %v917 = vpack.c.b16 %v733, %v725
      %v918 = vpack.c.b16 %v734, %v726
      %v919 = vpack.c.b16 %v735, %v727
      %v920 = vpack.c.b16 %v736, %v728
      %v921 = vpack.c.b16 %v737, %v729
      %v922 = vpack.c.b16 %v738, %v730
      %v923 = vpack.c.b16 %v739, %v731
      %v924 = vpack.c.b16 %v748, %v740
      %v925 = vpack.c.b16 %v749, %v741
      %v926 = vpack.c.b16 %v750, %v742
      %v927 = vpack.c.b16 %v751, %v743
      %v928 = vpack.c.b16 %v752, %v744
      %v929 = vpack.c.b16 %v753, %v745
      %v930 = vpack.c.b16 %v754, %v746
      %v931 = vpack.c.b16 %v755, %v747
      %v932 = vpack.c.b16 %v764, %v756
      %v933 = vpack.c.b16 %v765, %v757
      %v934 = vpack.c.b16 %v766, %v758
      %v935 = vpack.c.b16 %v767, %v759
      %v936 = vpack.c.b16 %v768, %v760
      %v937 = vpack.c.b16 %v769, %v761
      %v938 = vpack.c.b16 %v770, %v762
      %v939 = vpack.c.b16 %v771, %v763
      %v940 = vpack.c.b16 %v780, %v772
      %v941 = vpack.c.b16 %v781, %v773
      %v942 = vpack.c.b16 %v782, %v774
      %v943 = vpack.c.b16 %v783, %v775
      %v944 = vpack.c.b16 %v784, %v776
      %v945 = vpack.c.b16 %v785, %v777
      %v946 = vpack.c.b16 %v786, %v778
      %v947 = vpack.c.b16 %v787, %v779
      %v948 = vpack.c.b16 %v796, %v788
      %v949 = vpack.c.b16 %v797, %v789
      %v950 = vpack.c.b16 %v798, %v790
      %v951 = vpack.c.b16 %v799, %v791
      %v952 = vpack.c.b16 %v800, %v792
      %v953 = vpack.c.b16 %v801, %v793
      %v954 = vpack.c.b16 %v802, %v794
      %v955 = vpack.c.b16 %v803, %v795
      %v956 = vpack.c.b16 %v812, %v804
      %v957 = vpack.c.b16 %v813, %v805
      %v958 = vpack.c.b16 %v814, %v806
      %v959 = vpack.c.b16 %v815, %v807
      %v960 = vpack.c.b16 %v816, %v808
      %v961 = vpack.c.b16 %v817, %v809
      %v962 = vpack.c.b16 %v818, %v810
      %v963 = vpack.c.b16 %v819, %v811
      %v964 = vpack.c.b16 %v828, %v820
      %v965 = vpack.c.b16 %v829, %v821
      %v966 = vpack.c.b16 %v830, %v822
      %v967 = vpack.c.b16 %v831, %v823
      %v968 = vpack.c.b16 %v832, %v824
      %v969 = vpack.c.b16 %v833, %v825
      %v970 = vpack.c.b16 %v834, %v826
      %v971 = vpack.c.b16 %v835, %v827
      %v972 = vpack.c.b16 %v844, %v836
      %v973 = vpack.c.b16 %v845, %v837
      %v974 = vpack.c.b16 %v846, %v838
      %v975 = vpack.c.b16 %v847, %v839
      %v976 = vpack.c.b16 %v848, %v840
      %v977 = vpack.c.b16 %v849, %v841
      %v978 = vpack.c.b16 %v850, %v842
      %v979 = vpack.c.b16 %v851, %v843
      %1108 = vmatprep.subr.bf16.mxu0 %v909
      %1109 = vmatpush1.bf16.msra.mxu0 %v908
      %1110 = vmatprep.subr.bf16.mxu0 %v901
      %1111 = vmatpush1.bf16.msra.mxu0 %v900
      %1112 = vmatprep.subr.bf16.mxu0 %v893
      %1113 = vmatpush1.bf16.msra.mxu0 %v892
      %1114 = vmatprep.subr.bf16.mxu0 %v885
      %1115 = vmatpush1.bf16.msra.mxu0 %v884
      %1116 = vmatprep.subr.bf16.mxu0 %v877
      %1117 = vmatpush1.bf16.msra.mxu0 %v876
      %1118 = vmatprep.subr.bf16.mxu0 %v869
      %1119 = vmatpush1.bf16.msra.mxu0 %v868
      %1120 = vmatprep.subr.bf16.mxu0 %v861
      %1121 = vmatpush1.bf16.msra.mxu0 %v860
      %1122 = vmatprep.subr.bf16.mxu0 %v853
      %1123 = vmatpush1.bf16.msra.mxu0 %v852
      %1124 = vmatprep.subr.bf16.mxu0 %v973
      %1125 = vmatpush2.bf16.msra.mxu0 %v972
      %1126 = vmatprep.subr.bf16.mxu0 %v965
      %1127 = vmatpush2.bf16.msra.mxu0 %v964
      %1128 = vmatprep.subr.bf16.mxu0 %v957
      %1129 = vmatpush2.bf16.msra.mxu0 %v956
      %1130 = vmatprep.subr.bf16.mxu0 %v949
      %1131 = vmatpush2.bf16.msra.mxu0 %v948
      %1132 = vmatprep.subr.bf16.mxu0 %v941
      %1133 = vmatpush2.bf16.msra.mxu0 %v940
      %1134 = vmatprep.subr.bf16.mxu0 %v933
      %1135 = vmatpush2.bf16.msra.mxu0 %v932
      %1136 = vmatprep.subr.bf16.mxu0 %v925
      %1137 = vmatpush2.bf16.msra.mxu0 %v924
      %1138 = vmatprep.subr.bf16.mxu0 %v917
      %1139 = vmatpush2.bf16.msra.mxu0 %v916
      %1140 = vmatprep.mubr.bf16.mxu0 %v465
      %1141 = vmatmul.mubr.bf16.gmra.mxu0 %v464
      %v1142 = vpop.f32.mrf.mxu0
      %v1143 = vadd.f32 %v421, %v1142
      %v1144 = vpop.f32.mrf.mxu0
      %v1145 = vadd.f32 %v425, %v1144
      %v1146 = vpop.f32.mrf.mxu0
      %v1147 = vadd.f32 %v421, %v1146
      %v1148 = vpop.f32.mrf.mxu0
      %v1149 = vadd.f32 %v425, %v1148
      %1150 = vdwg.mxu0
      %1151 = vmatprep.subr.bf16.mxu0 %v911
      %1152 = vmatpush1.bf16.msra.mxu0 %v910
      %1153 = vmatprep.subr.bf16.mxu0 %v903
      %1154 = vmatpush1.bf16.msra.mxu0 %v902
      %1155 = vmatprep.subr.bf16.mxu0 %v895
      %1156 = vmatpush1.bf16.msra.mxu0 %v894
      %1157 = vmatprep.subr.bf16.mxu0 %v887
      %1158 = vmatpush1.bf16.msra.mxu0 %v886
      %1159 = vmatprep.subr.bf16.mxu0 %v879
      %1160 = vmatpush1.bf16.msra.mxu0 %v878
      %1161 = vmatprep.subr.bf16.mxu0 %v871
      %1162 = vmatpush1.bf16.msra.mxu0 %v870
      %1163 = vmatprep.subr.bf16.mxu0 %v863
      %1164 = vmatpush1.bf16.msra.mxu0 %v862
      %1165 = vmatprep.subr.bf16.mxu0 %v855
      %1166 = vmatpush1.bf16.msra.mxu0 %v854
      %1167 = vmatprep.subr.bf16.mxu0 %v975
      %1168 = vmatpush2.bf16.msra.mxu0 %v974
      %1169 = vmatprep.subr.bf16.mxu0 %v967
      %1170 = vmatpush2.bf16.msra.mxu0 %v966
      %1171 = vmatprep.subr.bf16.mxu0 %v959
      %1172 = vmatpush2.bf16.msra.mxu0 %v958
      %1173 = vmatprep.subr.bf16.mxu0 %v951
      %1174 = vmatpush2.bf16.msra.mxu0 %v950
      %1175 = vmatprep.subr.bf16.mxu0 %v943
      %1176 = vmatpush2.bf16.msra.mxu0 %v942
      %1177 = vmatprep.subr.bf16.mxu0 %v935
      %1178 = vmatpush2.bf16.msra.mxu0 %v934
      %1179 = vmatprep.subr.bf16.mxu0 %v927
      %1180 = vmatpush2.bf16.msra.mxu0 %v926
      %1181 = vmatprep.subr.bf16.mxu0 %v919
      %1182 = vmatpush2.bf16.msra.mxu0 %v918
      %1183 = vmatprep.mubr.bf16.mxu0 %v465
      %1184 = vmatmul.mubr.bf16.gmra.mxu0 %v464
      %v1185 = vpop.f32.mrf.mxu0
      %v1186 = vadd.f32 %v429, %v1185
      %v1187 = vpop.f32.mrf.mxu0
      %v1188 = vadd.f32 %v433, %v1187
      %v1189 = vpop.f32.mrf.mxu0
      %v1190 = vadd.f32 %v429, %v1189
      %v1191 = vpop.f32.mrf.mxu0
      %v1192 = vadd.f32 %v433, %v1191
      %1193 = vdwg.mxu0
      %1194 = vmatprep.subr.bf16.mxu0 %v913
      %1195 = vmatpush1.bf16.msra.mxu0 %v912
      %1196 = vmatprep.subr.bf16.mxu0 %v905
      %1197 = vmatpush1.bf16.msra.mxu0 %v904
      %1198 = vmatprep.subr.bf16.mxu0 %v897
      %1199 = vmatpush1.bf16.msra.mxu0 %v896
      %1200 = vmatprep.subr.bf16.mxu0 %v889
      %1201 = vmatpush1.bf16.msra.mxu0 %v888
      %1202 = vmatprep.subr.bf16.mxu0 %v881
      %1203 = vmatpush1.bf16.msra.mxu0 %v880
      %1204 = vmatprep.subr.bf16.mxu0 %v873
      %1205 = vmatpush1.bf16.msra.mxu0 %v872
      %1206 = vmatprep.subr.bf16.mxu0 %v865
      %1207 = vmatpush1.bf16.msra.mxu0 %v864
      %1208 = vmatprep.subr.bf16.mxu0 %v857
      %1209 = vmatpush1.bf16.msra.mxu0 %v856
      %1210 = vmatprep.subr.bf16.mxu0 %v977
      %1211 = vmatpush2.bf16.msra.mxu0 %v976
      %1212 = vmatprep.subr.bf16.mxu0 %v969
      %1213 = vmatpush2.bf16.msra.mxu0 %v968
      %1214 = vmatprep.subr.bf16.mxu0 %v961
      %1215 = vmatpush2.bf16.msra.mxu0 %v960
      %1216 = vmatprep.subr.bf16.mxu0 %v953
      %1217 = vmatpush2.bf16.msra.mxu0 %v952
      %1218 = vmatprep.subr.bf16.mxu0 %v945
      %1219 = vmatpush2.bf16.msra.mxu0 %v944
      %1220 = vmatprep.subr.bf16.mxu0 %v937
      %1221 = vmatpush2.bf16.msra.mxu0 %v936
      %1222 = vmatprep.subr.bf16.mxu0 %v929
      %1223 = vmatpush2.bf16.msra.mxu0 %v928
      %1224 = vmatprep.subr.bf16.mxu0 %v921
      %1225 = vmatpush2.bf16.msra.mxu0 %v920
      %1226 = vmatprep.mubr.bf16.mxu0 %v465
      %1227 = vmatmul.mubr.bf16.gmra.mxu0 %v464
      %v1228 = vpop.f32.mrf.mxu0
      %v1229 = vadd.f32 %v437, %v1228
      %v1230 = vpop.f32.mrf.mxu0
      %v1231 = vadd.f32 %v441, %v1230
      %v1232 = vpop.f32.mrf.mxu0
      %v1233 = vadd.f32 %v437, %v1232
      %v1234 = vpop.f32.mrf.mxu0
      %v1235 = vadd.f32 %v441, %v1234
      %1236 = vdwg.mxu0
      %1237 = vmatprep.subr.bf16.mxu0 %v915
      %1238 = vmatpush1.bf16.msra.mxu0 %v914
      %1239 = vmatprep.subr.bf16.mxu0 %v907
      %1240 = vmatpush1.bf16.msra.mxu0 %v906
      %1241 = vmatprep.subr.bf16.mxu0 %v899
      %1242 = vmatpush1.bf16.msra.mxu0 %v898
      %1243 = vmatprep.subr.bf16.mxu0 %v891
      %1244 = vmatpush1.bf16.msra.mxu0 %v890
      %1245 = vmatprep.subr.bf16.mxu0 %v883
      %1246 = vmatpush1.bf16.msra.mxu0 %v882
      %1247 = vmatprep.subr.bf16.mxu0 %v875
      %1248 = vmatpush1.bf16.msra.mxu0 %v874
      %1249 = vmatprep.subr.bf16.mxu0 %v867
      %1250 = vmatpush1.bf16.msra.mxu0 %v866
      %1251 = vmatprep.subr.bf16.mxu0 %v859
      %1252 = vmatpush1.bf16.msra.mxu0 %v858
      %1253 = vmatprep.subr.bf16.mxu0 %v979
      %1254 = vmatpush2.bf16.msra.mxu0 %v978
      %1255 = vmatprep.subr.bf16.mxu0 %v971
      %1256 = vmatpush2.bf16.msra.mxu0 %v970
      %1257 = vmatprep.subr.bf16.mxu0 %v963
      %1258 = vmatpush2.bf16.msra.mxu0 %v962
      %1259 = vmatprep.subr.bf16.mxu0 %v955
      %1260 = vmatpush2.bf16.msra.mxu0 %v954
      %1261 = vmatprep.subr.bf16.mxu0 %v947
      %1262 = vmatpush2.bf16.msra.mxu0 %v946
      %1263 = vmatprep.subr.bf16.mxu0 %v939
      %1264 = vmatpush2.bf16.msra.mxu0 %v938
      %1265 = vmatprep.subr.bf16.mxu0 %v931
      %1266 = vmatpush2.bf16.msra.mxu0 %v930
      %1267 = vmatprep.subr.bf16.mxu0 %v923
      %1268 = vmatpush2.bf16.msra.mxu0 %v922
      %1269 = vmatprep.mubr.bf16.mxu0 %v465
      %1270 = vmatmul.mubr.bf16.gmra.mxu0 %v464
      %v1271 = vpop.f32.mrf.mxu0
      %v1272 = vadd.f32 %v445, %v1271
      %v1273 = vpop.f32.mrf.mxu0
      %v1274 = vadd.f32 %v449, %v1273
      %v1275 = vpop.f32.mrf.mxu0
      %v1276 = vadd.f32 %v445, %v1275
      %v1277 = vpop.f32.mrf.mxu0
      %v1278 = vadd.f32 %v449, %v1277
      %1279 = vdwg.mxu0
      %v1280 = vmax.f32 %v1143, 0.0
      %v1281 = vmax.f32 %v1145, 0.0
      %v1282 = vmax.f32 %v1186, 0.0
      %v1283 = vmax.f32 %v1188, 0.0
      %v1284 = vmax.f32 %v1229, 0.0
      %v1285 = vmax.f32 %v1231, 0.0
      %v1286 = vmax.f32 %v1272, 0.0
      %v1287 = vmax.f32 %v1274, 0.0
      %v1288 = vmax.f32 %v1147, 0.0
      %v1289 = vmax.f32 %v1149, 0.0
      %v1290 = vmax.f32 %v1190, 0.0
      %v1291 = vmax.f32 %v1192, 0.0
      %v1292 = vmax.f32 %v1233, 0.0
      %v1293 = vmax.f32 %v1235, 0.0
      %v1294 = vmax.f32 %v1276, 0.0
      %v1295 = vmax.f32 %v1278, 0.0
      %v1296 = vpack.c.bf16 %v1288, %v1280
      %v1297 = vpack.c.bf16 %v1289, %v1281
      %v1298 = vpack.c.bf16 %v1290, %v1282
      %v1299 = vpack.c.bf16 %v1291, %v1283
      %v1300 = vpack.c.bf16 %v1292, %v1284
      %v1301 = vpack.c.bf16 %v1293, %v1285
      %v1302 = vpack.c.bf16 %v1294, %v1286
      %v1303 = vpack.c.bf16 %v1295, %v1287
      %v1304 = vld [vmem:[%s3] sm:$0xff]
      %v1305 = vld [vmem:[%s3 + $0x8] sm:$0xff]
      %v1306 = vld [vmem:[%s3 + $0x10] sm:$0xff]
      %v1307 = vld [vmem:[%s3 + $0x18] sm:$0xff]
      %v1308 = vld [vmem:[%s3 + $0x20] sm:$0xff]
      %v1309 = vld [vmem:[%s3 + $0x28] sm:$0xff]
      %v1310 = vld [vmem:[%s3 + $0x30] sm:$0xff]
      %v1311 = vld [vmem:[%s3 + $0x38] sm:$0xff]
      %v1312 = vld [vmem:[%s3 + $0x40] sm:$0xff]
      %v1313 = vld [vmem:[%s3 + $0x48] sm:$0xff]
      %v1314 = vld [vmem:[%s3 + $0x50] sm:$0xff]
      %v1315 = vld [vmem:[%s3 + $0x58] sm:$0xff]
      %v1316 = vld [vmem:[%s3 + $0x60] sm:$0xff]
      %v1317 = vld [vmem:[%s3 + $0x68] sm:$0xff]
      %v1318 = vld [vmem:[%s3 + $0x70] sm:$0xff]
      %v1319 = vld [vmem:[%s3 + $0x78] sm:$0xff]
      %v1320 = vld [vmem:[%s3 + $0x80] sm:$0xff]
      %v1321 = vld [vmem:[%s3 + $0x88] sm:$0xff]
      %v1322 = vld [vmem:[%s3 + $0x90] sm:$0xff]
      %v1323 = vld [vmem:[%s3 + $0x98] sm:$0xff]
      %v1324 = vld [vmem:[%s3 + $0xa0] sm:$0xff]
      %v1325 = vld [vmem:[%s3 + $0xa8] sm:$0xff]
      %v1326 = vld [vmem:[%s3 + $0xb0] sm:$0xff]
      %v1327 = vld [vmem:[%s3 + $0xb8] sm:$0xff]
      %v1328 = vld [vmem:[%s3 + $0xc0] sm:$0xff]
      %v1329 = vld [vmem:[%s3 + $0xc8] sm:$0xff]
      %v1330 = vld [vmem:[%s3 + $0xd0] sm:$0xff]
      %v1331 = vld [vmem:[%s3 + $0xd8] sm:$0xff]
      %v1332 = vld [vmem:[%s3 + $0xe0] sm:$0xff]
      %v1333 = vld [vmem:[%s3 + $0xe8] sm:$0xff]
      %v1334 = vld [vmem:[%s3 + $0xf0] sm:$0xff]
      %v1335 = vld [vmem:[%s3 + $0xf8] sm:$0xff]
      %v1336 = vld [vmem:[%s3 + $0x100] sm:$0xff]
      %v1337 = vld [vmem:[%s3 + $0x108] sm:$0xff]
      %v1338 = vld [vmem:[%s3 + $0x110] sm:$0xff]
      %v1339 = vld [vmem:[%s3 + $0x118] sm:$0xff]
      %v1340 = vld [vmem:[%s3 + $0x120] sm:$0xff]
      %v1341 = vld [vmem:[%s3 + $0x128] sm:$0xff]
      %v1342 = vld [vmem:[%s3 + $0x130] sm:$0xff]
      %v1343 = vld [vmem:[%s3 + $0x138] sm:$0xff]
      %v1344 = vld [vmem:[%s3 + $0x140] sm:$0xff]
      %v1345 = vld [vmem:[%s3 + $0x148] sm:$0xff]
      %v1346 = vld [vmem:[%s3 + $0x150] sm:$0xff]
      %v1347 = vld [vmem:[%s3 + $0x158] sm:$0xff]
      %v1348 = vld [vmem:[%s3 + $0x160] sm:$0xff]
      %v1349 = vld [vmem:[%s3 + $0x168] sm:$0xff]
      %v1350 = vld [vmem:[%s3 + $0x170] sm:$0xff]
      %v1351 = vld [vmem:[%s3 + $0x178] sm:$0xff]
      %v1352 = vld [vmem:[%s3 + $0x180] sm:$0xff]
      %v1353 = vld [vmem:[%s3 + $0x188] sm:$0xff]
      %v1354 = vld [vmem:[%s3 + $0x190] sm:$0xff]
      %v1355 = vld [vmem:[%s3 + $0x198] sm:$0xff]
      %v1356 = vld [vmem:[%s3 + $0x1a0] sm:$0xff]
      %v1357 = vld [vmem:[%s3 + $0x1a8] sm:$0xff]
      %v1358 = vld [vmem:[%s3 + $0x1b0] sm:$0xff]
      %v1359 = vld [vmem:[%s3 + $0x1b8] sm:$0xff]
      %v1360 = vld [vmem:[%s3 + $0x1c0] sm:$0xff]
      %v1361 = vld [vmem:[%s3 + $0x1c8] sm:$0xff]
      %v1362 = vld [vmem:[%s3 + $0x1d0] sm:$0xff]
      %v1363 = vld [vmem:[%s3 + $0x1d8] sm:$0xff]
      %v1364 = vld [vmem:[%s3 + $0x1e0] sm:$0xff]
      %v1365 = vld [vmem:[%s3 + $0x1e8] sm:$0xff]
      %v1366 = vld [vmem:[%s3 + $0x1f0] sm:$0xff]
      %v1367 = vld [vmem:[%s3 + $0x1f8] sm:$0xff]
      %v1368 = vld [vmem:[%s3 + $0x200] sm:$0xff]
      %v1369 = vld [vmem:[%s3 + $0x208] sm:$0xff]
      %v1370 = vld [vmem:[%s3 + $0x210] sm:$0xff]
      %v1371 = vld [vmem:[%s3 + $0x218] sm:$0xff]
      %v1372 = vld [vmem:[%s3 + $0x220] sm:$0xff]
      %v1373 = vld [vmem:[%s3 + $0x228] sm:$0xff]
      %v1374 = vld [vmem:[%s3 + $0x230] sm:$0xff]
      %v1375 = vld [vmem:[%s3 + $0x238] sm:$0xff]
      %v1376 = vld [vmem:[%s3 + $0x240] sm:$0xff]
      %v1377 = vld [vmem:[%s3 + $0x248] sm:$0xff]
      %v1378 = vld [vmem:[%s3 + $0x250] sm:$0xff]
      %v1379 = vld [vmem:[%s3 + $0x258] sm:$0xff]
      %v1380 = vld [vmem:[%s3 + $0x260] sm:$0xff]
      %v1381 = vld [vmem:[%s3 + $0x268] sm:$0xff]
      %v1382 = vld [vmem:[%s3 + $0x270] sm:$0xff]
      %v1383 = vld [vmem:[%s3 + $0x278] sm:$0xff]
      %v1384 = vld [vmem:[%s3 + $0x280] sm:$0xff]
      %v1385 = vld [vmem:[%s3 + $0x288] sm:$0xff]
      %v1386 = vld [vmem:[%s3 + $0x290] sm:$0xff]
      %v1387 = vld [vmem:[%s3 + $0x298] sm:$0xff]
      %v1388 = vld [vmem:[%s3 + $0x2a0] sm:$0xff]
      %v1389 = vld [vmem:[%s3 + $0x2a8] sm:$0xff]
      %v1390 = vld [vmem:[%s3 + $0x2b0] sm:$0xff]
      %v1391 = vld [vmem:[%s3 + $0x2b8] sm:$0xff]
      %v1392 = vld [vmem:[%s3 + $0x2c0] sm:$0xff]
      %v1393 = vld [vmem:[%s3 + $0x2c8] sm:$0xff]
      %v1394 = vld [vmem:[%s3 + $0x2d0] sm:$0xff]
      %v1395 = vld [vmem:[%s3 + $0x2d8] sm:$0xff]
      %v1396 = vld [vmem:[%s3 + $0x2e0] sm:$0xff]
      %v1397 = vld [vmem:[%s3 + $0x2e8] sm:$0xff]
      %v1398 = vld [vmem:[%s3 + $0x2f0] sm:$0xff]
      %v1399 = vld [vmem:[%s3 + $0x2f8] sm:$0xff]
      %v1400 = vld [vmem:[%s3 + $0x300] sm:$0xff]
      %v1401 = vld [vmem:[%s3 + $0x308] sm:$0xff]
      %v1402 = vld [vmem:[%s3 + $0x310] sm:$0xff]
      %v1403 = vld [vmem:[%s3 + $0x318] sm:$0xff]
      %v1404 = vld [vmem:[%s3 + $0x320] sm:$0xff]
      %v1405 = vld [vmem:[%s3 + $0x328] sm:$0xff]
      %v1406 = vld [vmem:[%s3 + $0x330] sm:$0xff]
      %v1407 = vld [vmem:[%s3 + $0x338] sm:$0xff]
      %v1408 = vld [vmem:[%s3 + $0x340] sm:$0xff]
      %v1409 = vld [vmem:[%s3 + $0x348] sm:$0xff]
      %v1410 = vld [vmem:[%s3 + $0x350] sm:$0xff]
      %v1411 = vld [vmem:[%s3 + $0x358] sm:$0xff]
      %v1412 = vld [vmem:[%s3 + $0x360] sm:$0xff]
      %v1413 = vld [vmem:[%s3 + $0x368] sm:$0xff]
      %v1414 = vld [vmem:[%s3 + $0x370] sm:$0xff]
      %v1415 = vld [vmem:[%s3 + $0x378] sm:$0xff]
      %v1416 = vld [vmem:[%s3 + $0x380] sm:$0xff]
      %v1417 = vld [vmem:[%s3 + $0x388] sm:$0xff]
      %v1418 = vld [vmem:[%s3 + $0x390] sm:$0xff]
      %v1419 = vld [vmem:[%s3 + $0x398] sm:$0xff]
      %v1420 = vld [vmem:[%s3 + $0x3a0] sm:$0xff]
      %v1421 = vld [vmem:[%s3 + $0x3a8] sm:$0xff]
      %v1422 = vld [vmem:[%s3 + $0x3b0] sm:$0xff]
      %v1423 = vld [vmem:[%s3 + $0x3b8] sm:$0xff]
      %v1424 = vld [vmem:[%s3 + $0x3c0] sm:$0xff]
      %v1425 = vld [vmem:[%s3 + $0x3c8] sm:$0xff]
      %v1426 = vld [vmem:[%s3 + $0x3d0] sm:$0xff]
      %v1427 = vld [vmem:[%s3 + $0x3d8] sm:$0xff]
      %v1428 = vld [vmem:[%s3 + $0x3e0] sm:$0xff]
      %v1429 = vld [vmem:[%s3 + $0x3e8] sm:$0xff]
      %v1430 = vld [vmem:[%s3 + $0x3f0] sm:$0xff]
      %v1431 = vld [vmem:[%s3 + $0x3f8] sm:$0xff]
      %v1432 = vld [vmem:[%s3 + $0x400] sm:$0xff]
      %v1433 = vld [vmem:[%s3 + $0x408] sm:$0xff]
      %v1434 = vld [vmem:[%s3 + $0x410] sm:$0xff]
      %v1435 = vld [vmem:[%s3 + $0x418] sm:$0xff]
      %v1436 = vld [vmem:[%s3 + $0x420] sm:$0xff]
      %v1437 = vld [vmem:[%s3 + $0x428] sm:$0xff]
      %v1438 = vld [vmem:[%s3 + $0x430] sm:$0xff]
      %v1439 = vld [vmem:[%s3 + $0x438] sm:$0xff]
      %v1440 = vld [vmem:[%s3 + $0x440] sm:$0xff]
      %v1441 = vld [vmem:[%s3 + $0x448] sm:$0xff]
      %v1442 = vld [vmem:[%s3 + $0x450] sm:$0xff]
      %v1443 = vld [vmem:[%s3 + $0x458] sm:$0xff]
      %v1444 = vld [vmem:[%s3 + $0x460] sm:$0xff]
      %v1445 = vld [vmem:[%s3 + $0x468] sm:$0xff]
      %v1446 = vld [vmem:[%s3 + $0x470] sm:$0xff]
      %v1447 = vld [vmem:[%s3 + $0x478] sm:$0xff]
      %v1448 = vld [vmem:[%s3 + $0x480] sm:$0xff]
      %v1449 = vld [vmem:[%s3 + $0x488] sm:$0xff]
      %v1450 = vld [vmem:[%s3 + $0x490] sm:$0xff]
      %v1451 = vld [vmem:[%s3 + $0x498] sm:$0xff]
      %v1452 = vld [vmem:[%s3 + $0x4a0] sm:$0xff]
      %v1453 = vld [vmem:[%s3 + $0x4a8] sm:$0xff]
      %v1454 = vld [vmem:[%s3 + $0x4b0] sm:$0xff]
      %v1455 = vld [vmem:[%s3 + $0x4b8] sm:$0xff]
      %v1456 = vld [vmem:[%s3 + $0x4c0] sm:$0xff]
      %v1457 = vld [vmem:[%s3 + $0x4c8] sm:$0xff]
      %v1458 = vld [vmem:[%s3 + $0x4d0] sm:$0xff]
      %v1459 = vld [vmem:[%s3 + $0x4d8] sm:$0xff]
      %v1460 = vld [vmem:[%s3 + $0x4e0] sm:$0xff]
      %v1461 = vld [vmem:[%s3 + $0x4e8] sm:$0xff]
      %v1462 = vld [vmem:[%s3 + $0x4f0] sm:$0xff]
      %v1463 = vld [vmem:[%s3 + $0x4f8] sm:$0xff]
      %v1464 = vld [vmem:[%s3 + $0x500] sm:$0xff]
      %v1465 = vld [vmem:[%s3 + $0x508] sm:$0xff]
      %v1466 = vld [vmem:[%s3 + $0x510] sm:$0xff]
      %v1467 = vld [vmem:[%s3 + $0x518] sm:$0xff]
      %v1468 = vld [vmem:[%s3 + $0x520] sm:$0xff]
      %v1469 = vld [vmem:[%s3 + $0x528] sm:$0xff]
      %v1470 = vld [vmem:[%s3 + $0x530] sm:$0xff]
      %v1471 = vld [vmem:[%s3 + $0x538] sm:$0xff]
      %v1472 = vld [vmem:[%s3 + $0x540] sm:$0xff]
      %v1473 = vld [vmem:[%s3 + $0x548] sm:$0xff]
      %v1474 = vld [vmem:[%s3 + $0x550] sm:$0xff]
      %v1475 = vld [vmem:[%s3 + $0x558] sm:$0xff]
      %v1476 = vld [vmem:[%s3 + $0x560] sm:$0xff]
      %v1477 = vld [vmem:[%s3 + $0x568] sm:$0xff]
      %v1478 = vld [vmem:[%s3 + $0x570] sm:$0xff]
      %v1479 = vld [vmem:[%s3 + $0x578] sm:$0xff]
      %v1480 = vld [vmem:[%s3 + $0x580] sm:$0xff]
      %v1481 = vld [vmem:[%s3 + $0x588] sm:$0xff]
      %v1482 = vld [vmem:[%s3 + $0x590] sm:$0xff]
      %v1483 = vld [vmem:[%s3 + $0x598] sm:$0xff]
      %v1484 = vld [vmem:[%s3 + $0x5a0] sm:$0xff]
      %v1485 = vld [vmem:[%s3 + $0x5a8] sm:$0xff]
      %v1486 = vld [vmem:[%s3 + $0x5b0] sm:$0xff]
      %v1487 = vld [vmem:[%s3 + $0x5b8] sm:$0xff]
      %v1488 = vld [vmem:[%s3 + $0x5c0] sm:$0xff]
      %v1489 = vld [vmem:[%s3 + $0x5c8] sm:$0xff]
      %v1490 = vld [vmem:[%s3 + $0x5d0] sm:$0xff]
      %v1491 = vld [vmem:[%s3 + $0x5d8] sm:$0xff]
      %v1492 = vld [vmem:[%s3 + $0x5e0] sm:$0xff]
      %v1493 = vld [vmem:[%s3 + $0x5e8] sm:$0xff]
      %v1494 = vld [vmem:[%s3 + $0x5f0] sm:$0xff]
      %v1495 = vld [vmem:[%s3 + $0x5f8] sm:$0xff]
      %v1496 = vld [vmem:[%s3 + $0x600] sm:$0xff]
      %v1497 = vld [vmem:[%s3 + $0x608] sm:$0xff]
      %v1498 = vld [vmem:[%s3 + $0x610] sm:$0xff]
      %v1499 = vld [vmem:[%s3 + $0x618] sm:$0xff]
      %v1500 = vld [vmem:[%s3 + $0x620] sm:$0xff]
      %v1501 = vld [vmem:[%s3 + $0x628] sm:$0xff]
      %v1502 = vld [vmem:[%s3 + $0x630] sm:$0xff]
      %v1503 = vld [vmem:[%s3 + $0x638] sm:$0xff]
      %v1504 = vld [vmem:[%s3 + $0x640] sm:$0xff]
      %v1505 = vld [vmem:[%s3 + $0x648] sm:$0xff]
      %v1506 = vld [vmem:[%s3 + $0x650] sm:$0xff]
      %v1507 = vld [vmem:[%s3 + $0x658] sm:$0xff]
      %v1508 = vld [vmem:[%s3 + $0x660] sm:$0xff]
      %v1509 = vld [vmem:[%s3 + $0x668] sm:$0xff]
      %v1510 = vld [vmem:[%s3 + $0x670] sm:$0xff]
      %v1511 = vld [vmem:[%s3 + $0x678] sm:$0xff]
      %v1512 = vld [vmem:[%s3 + $0x680] sm:$0xff]
      %v1513 = vld [vmem:[%s3 + $0x688] sm:$0xff]
      %v1514 = vld [vmem:[%s3 + $0x690] sm:$0xff]
      %v1515 = vld [vmem:[%s3 + $0x698] sm:$0xff]
      %v1516 = vld [vmem:[%s3 + $0x6a0] sm:$0xff]
      %v1517 = vld [vmem:[%s3 + $0x6a8] sm:$0xff]
      %v1518 = vld [vmem:[%s3 + $0x6b0] sm:$0xff]
      %v1519 = vld [vmem:[%s3 + $0x6b8] sm:$0xff]
      %v1520 = vld [vmem:[%s3 + $0x6c0] sm:$0xff]
      %v1521 = vld [vmem:[%s3 + $0x6c8] sm:$0xff]
      %v1522 = vld [vmem:[%s3 + $0x6d0] sm:$0xff]
      %v1523 = vld [vmem:[%s3 + $0x6d8] sm:$0xff]
      %v1524 = vld [vmem:[%s3 + $0x6e0] sm:$0xff]
      %v1525 = vld [vmem:[%s3 + $0x6e8] sm:$0xff]
      %v1526 = vld [vmem:[%s3 + $0x6f0] sm:$0xff]
      %v1527 = vld [vmem:[%s3 + $0x6f8] sm:$0xff]
      %v1528 = vld [vmem:[%s3 + $0x700] sm:$0xff]
      %v1529 = vld [vmem:[%s3 + $0x708] sm:$0xff]
      %v1530 = vld [vmem:[%s3 + $0x710] sm:$0xff]
      %v1531 = vld [vmem:[%s3 + $0x718] sm:$0xff]
      %v1532 = vld [vmem:[%s3 + $0x720] sm:$0xff]
      %v1533 = vld [vmem:[%s3 + $0x728] sm:$0xff]
      %v1534 = vld [vmem:[%s3 + $0x730] sm:$0xff]
      %v1535 = vld [vmem:[%s3 + $0x738] sm:$0xff]
      %v1536 = vld [vmem:[%s3 + $0x740] sm:$0xff]
      %v1537 = vld [vmem:[%s3 + $0x748] sm:$0xff]
      %v1538 = vld [vmem:[%s3 + $0x750] sm:$0xff]
      %v1539 = vld [vmem:[%s3 + $0x758] sm:$0xff]
      %v1540 = vld [vmem:[%s3 + $0x760] sm:$0xff]
      %v1541 = vld [vmem:[%s3 + $0x768] sm:$0xff]
      %v1542 = vld [vmem:[%s3 + $0x770] sm:$0xff]
      %v1543 = vld [vmem:[%s3 + $0x778] sm:$0xff]
      %v1544 = vld [vmem:[%s3 + $0x780] sm:$0xff]
      %v1545 = vld [vmem:[%s3 + $0x788] sm:$0xff]
      %v1546 = vld [vmem:[%s3 + $0x790] sm:$0xff]
      %v1547 = vld [vmem:[%s3 + $0x798] sm:$0xff]
      %v1548 = vld [vmem:[%s3 + $0x7a0] sm:$0xff]
      %v1549 = vld [vmem:[%s3 + $0x7a8] sm:$0xff]
      %v1550 = vld [vmem:[%s3 + $0x7b0] sm:$0xff]
      %v1551 = vld [vmem:[%s3 + $0x7b8] sm:$0xff]
      %v1552 = vld [vmem:[%s3 + $0x7c0] sm:$0xff]
      %v1553 = vld [vmem:[%s3 + $0x7c8] sm:$0xff]
      %v1554 = vld [vmem:[%s3 + $0x7d0] sm:$0xff]
      %v1555 = vld [vmem:[%s3 + $0x7d8] sm:$0xff]
      %v1556 = vld [vmem:[%s3 + $0x7e0] sm:$0xff]
      %v1557 = vld [vmem:[%s3 + $0x7e8] sm:$0xff]
      %v1558 = vld [vmem:[%s3 + $0x7f0] sm:$0xff]
      %v1559 = vld [vmem:[%s3 + $0x7f8] sm:$0xff]
      %v1560 = vld [vmem:[%s4] sm:$0xf]
      %v1562 = vlaneseq
      %v1563 = vshrl.u32 %v1562, 7
      %v1564 = vsub.s32 0, %v1563
      %v1565 = vrot.slane %v1560, %v1564
      %v1566 = vlaneseq
      %v1567 = vshrl.u32 %v1566, 7
      %v1568 = vsub.s32 1, %v1567
      %v1569 = vrot.slane %v1560, %v1568
      %v1570 = vlaneseq
      %v1571 = vshrl.u32 %v1570, 7
      %v1572 = vsub.s32 2, %v1571
      %v1573 = vrot.slane %v1560, %v1572
      %v1574 = vlaneseq
      %v1575 = vshrl.u32 %v1574, 7
      %v1576 = vsub.s32 3, %v1575
      %v1577 = vrot.slane %v1560, %v1576
      %v1838 = vunpack.c.l.b16 %v1304
      %v1839 = vunpack.c.h.b16 %v1304
      %v1840 = vunpack.c.l.b16 %v1305
      %v1841 = vunpack.c.h.b16 %v1305
      %v1842 = vunpack.c.l.b16 %v1306
      %v1843 = vunpack.c.h.b16 %v1306
      %v1844 = vunpack.c.l.b16 %v1307
      %v1845 = vunpack.c.h.b16 %v1307
      %v1846 = vunpack.c.l.b16 %v1308
      %v1847 = vunpack.c.h.b16 %v1308
      %v1848 = vunpack.c.l.b16 %v1309
      %v1849 = vunpack.c.h.b16 %v1309
      %v1850 = vunpack.c.l.b16 %v1310
      %v1851 = vunpack.c.h.b16 %v1310
      %v1852 = vunpack.c.l.b16 %v1311
      %v1853 = vunpack.c.h.b16 %v1311
      %v1854 = vunpack.c.l.b16 %v1312
      %v1855 = vunpack.c.h.b16 %v1312
      %v1856 = vunpack.c.l.b16 %v1313
      %v1857 = vunpack.c.h.b16 %v1313
      %v1858 = vunpack.c.l.b16 %v1314
      %v1859 = vunpack.c.h.b16 %v1314
      %v1860 = vunpack.c.l.b16 %v1315
      %v1861 = vunpack.c.h.b16 %v1315
      %v1862 = vunpack.c.l.b16 %v1316
      %v1863 = vunpack.c.h.b16 %v1316
      %v1864 = vunpack.c.l.b16 %v1317
      %v1865 = vunpack.c.h.b16 %v1317
      %v1866 = vunpack.c.l.b16 %v1318
      %v1867 = vunpack.c.h.b16 %v1318
      %v1868 = vunpack.c.l.b16 %v1319
      %v1869 = vunpack.c.h.b16 %v1319
      %v1870 = vunpack.c.l.b16 %v1320
      %v1871 = vunpack.c.h.b16 %v1320
      %v1872 = vunpack.c.l.b16 %v1321
      %v1873 = vunpack.c.h.b16 %v1321
      %v1874 = vunpack.c.l.b16 %v1322
      %v1875 = vunpack.c.h.b16 %v1322
      %v1876 = vunpack.c.l.b16 %v1323
      %v1877 = vunpack.c.h.b16 %v1323
      %v1878 = vunpack.c.l.b16 %v1324
      %v1879 = vunpack.c.h.b16 %v1324
      %v1880 = vunpack.c.l.b16 %v1325
      %v1881 = vunpack.c.h.b16 %v1325
      %v1882 = vunpack.c.l.b16 %v1326
      %v1883 = vunpack.c.h.b16 %v1326
      %v1884 = vunpack.c.l.b16 %v1327
      %v1885 = vunpack.c.h.b16 %v1327
      %v1886 = vunpack.c.l.b16 %v1328
      %v1887 = vunpack.c.h.b16 %v1328
      %v1888 = vunpack.c.l.b16 %v1329
      %v1889 = vunpack.c.h.b16 %v1329
      %v1890 = vunpack.c.l.b16 %v1330
      %v1891 = vunpack.c.h.b16 %v1330
      %v1892 = vunpack.c.l.b16 %v1331
      %v1893 = vunpack.c.h.b16 %v1331
      %v1894 = vunpack.c.l.b16 %v1332
      %v1895 = vunpack.c.h.b16 %v1332
      %v1896 = vunpack.c.l.b16 %v1333
      %v1897 = vunpack.c.h.b16 %v1333
      %v1898 = vunpack.c.l.b16 %v1334
      %v1899 = vunpack.c.h.b16 %v1334
      %v1900 = vunpack.c.l.b16 %v1335
      %v1901 = vunpack.c.h.b16 %v1335
      %v1902 = vunpack.c.l.b16 %v1336
      %v1903 = vunpack.c.h.b16 %v1336
      %v1904 = vunpack.c.l.b16 %v1337
      %v1905 = vunpack.c.h.b16 %v1337
      %v1906 = vunpack.c.l.b16 %v1338
      %v1907 = vunpack.c.h.b16 %v1338
      %v1908 = vunpack.c.l.b16 %v1339
      %v1909 = vunpack.c.h.b16 %v1339
      %v1910 = vunpack.c.l.b16 %v1340
      %v1911 = vunpack.c.h.b16 %v1340
      %v1912 = vunpack.c.l.b16 %v1341
      %v1913 = vunpack.c.h.b16 %v1341
      %v1914 = vunpack.c.l.b16 %v1342
      %v1915 = vunpack.c.h.b16 %v1342
      %v1916 = vunpack.c.l.b16 %v1343
      %v1917 = vunpack.c.h.b16 %v1343
      %v1918 = vunpack.c.l.b16 %v1344
      %v1919 = vunpack.c.h.b16 %v1344
      %v1920 = vunpack.c.l.b16 %v1345
      %v1921 = vunpack.c.h.b16 %v1345
      %v1922 = vunpack.c.l.b16 %v1346
      %v1923 = vunpack.c.h.b16 %v1346
      %v1924 = vunpack.c.l.b16 %v1347
      %v1925 = vunpack.c.h.b16 %v1347
      %v1926 = vunpack.c.l.b16 %v1348
      %v1927 = vunpack.c.h.b16 %v1348
      %v1928 = vunpack.c.l.b16 %v1349
      %v1929 = vunpack.c.h.b16 %v1349
      %v1930 = vunpack.c.l.b16 %v1350
      %v1931 = vunpack.c.h.b16 %v1350
      %v1932 = vunpack.c.l.b16 %v1351
      %v1933 = vunpack.c.h.b16 %v1351
      %v1934 = vunpack.c.l.b16 %v1352
      %v1935 = vunpack.c.h.b16 %v1352
      %v1936 = vunpack.c.l.b16 %v1353
      %v1937 = vunpack.c.h.b16 %v1353
      %v1938 = vunpack.c.l.b16 %v1354
      %v1939 = vunpack.c.h.b16 %v1354
      %v1940 = vunpack.c.l.b16 %v1355
      %v1941 = vunpack.c.h.b16 %v1355
      %v1942 = vunpack.c.l.b16 %v1356
      %v1943 = vunpack.c.h.b16 %v1356
      %v1944 = vunpack.c.l.b16 %v1357
      %v1945 = vunpack.c.h.b16 %v1357
      %v1946 = vunpack.c.l.b16 %v1358
      %v1947 = vunpack.c.h.b16 %v1358
      %v1948 = vunpack.c.l.b16 %v1359
      %v1949 = vunpack.c.h.b16 %v1359
      %v1950 = vunpack.c.l.b16 %v1360
      %v1951 = vunpack.c.h.b16 %v1360
      %v1952 = vunpack.c.l.b16 %v1361
      %v1953 = vunpack.c.h.b16 %v1361
      %v1954 = vunpack.c.l.b16 %v1362
      %v1955 = vunpack.c.h.b16 %v1362
      %v1956 = vunpack.c.l.b16 %v1363
      %v1957 = vunpack.c.h.b16 %v1363
      %v1958 = vunpack.c.l.b16 %v1364
      %v1959 = vunpack.c.h.b16 %v1364
      %v1960 = vunpack.c.l.b16 %v1365
      %v1961 = vunpack.c.h.b16 %v1365
      %v1962 = vunpack.c.l.b16 %v1366
      %v1963 = vunpack.c.h.b16 %v1366
      %v1964 = vunpack.c.l.b16 %v1367
      %v1965 = vunpack.c.h.b16 %v1367
      %v1966 = vunpack.c.l.b16 %v1368
      %v1967 = vunpack.c.h.b16 %v1368
      %v1968 = vunpack.c.l.b16 %v1369
      %v1969 = vunpack.c.h.b16 %v1369
      %v1970 = vunpack.c.l.b16 %v1370
      %v1971 = vunpack.c.h.b16 %v1370
      %v1972 = vunpack.c.l.b16 %v1371
      %v1973 = vunpack.c.h.b16 %v1371
      %v1974 = vunpack.c.l.b16 %v1372
      %v1975 = vunpack.c.h.b16 %v1372
      %v1976 = vunpack.c.l.b16 %v1373
      %v1977 = vunpack.c.h.b16 %v1373
      %v1978 = vunpack.c.l.b16 %v1374
      %v1979 = vunpack.c.h.b16 %v1374
      %v1980 = vunpack.c.l.b16 %v1375
      %v1981 = vunpack.c.h.b16 %v1375
      %v1982 = vunpack.c.l.b16 %v1376
      %v1983 = vunpack.c.h.b16 %v1376
      %v1984 = vunpack.c.l.b16 %v1377
      %v1985 = vunpack.c.h.b16 %v1377
      %v1986 = vunpack.c.l.b16 %v1378
      %v1987 = vunpack.c.h.b16 %v1378
      %v1988 = vunpack.c.l.b16 %v1379
      %v1989 = vunpack.c.h.b16 %v1379
      %v1990 = vunpack.c.l.b16 %v1380
      %v1991 = vunpack.c.h.b16 %v1380
      %v1992 = vunpack.c.l.b16 %v1381
      %v1993 = vunpack.c.h.b16 %v1381
      %v1994 = vunpack.c.l.b16 %v1382
      %v1995 = vunpack.c.h.b16 %v1382
      %v1996 = vunpack.c.l.b16 %v1383
      %v1997 = vunpack.c.h.b16 %v1383
      %v1998 = vunpack.c.l.b16 %v1384
      %v1999 = vunpack.c.h.b16 %v1384
      %v2000 = vunpack.c.l.b16 %v1385
      %v2001 = vunpack.c.h.b16 %v1385
      %v2002 = vunpack.c.l.b16 %v1386
      %v2003 = vunpack.c.h.b16 %v1386
      %v2004 = vunpack.c.l.b16 %v1387
      %v2005 = vunpack.c.h.b16 %v1387
      %v2006 = vunpack.c.l.b16 %v1388
      %v2007 = vunpack.c.h.b16 %v1388
      %v2008 = vunpack.c.l.b16 %v1389
      %v2009 = vunpack.c.h.b16 %v1389
      %v2010 = vunpack.c.l.b16 %v1390
      %v2011 = vunpack.c.h.b16 %v1390
      %v2012 = vunpack.c.l.b16 %v1391
      %v2013 = vunpack.c.h.b16 %v1391
      %v2014 = vunpack.c.l.b16 %v1392
      %v2015 = vunpack.c.h.b16 %v1392
      %v2016 = vunpack.c.l.b16 %v1393
      %v2017 = vunpack.c.h.b16 %v1393
      %v2018 = vunpack.c.l.b16 %v1394
      %v2019 = vunpack.c.h.b16 %v1394
      %v2020 = vunpack.c.l.b16 %v1395
      %v2021 = vunpack.c.h.b16 %v1395
      %v2022 = vunpack.c.l.b16 %v1396
      %v2023 = vunpack.c.h.b16 %v1396
      %v2024 = vunpack.c.l.b16 %v1397
      %v2025 = vunpack.c.h.b16 %v1397
      %v2026 = vunpack.c.l.b16 %v1398
      %v2027 = vunpack.c.h.b16 %v1398
      %v2028 = vunpack.c.l.b16 %v1399
      %v2029 = vunpack.c.h.b16 %v1399
      %v2030 = vunpack.c.l.b16 %v1400
      %v2031 = vunpack.c.h.b16 %v1400
      %v2032 = vunpack.c.l.b16 %v1401
      %v2033 = vunpack.c.h.b16 %v1401
      %v2034 = vunpack.c.l.b16 %v1402
      %v2035 = vunpack.c.h.b16 %v1402
      %v2036 = vunpack.c.l.b16 %v1403
      %v2037 = vunpack.c.h.b16 %v1403
      %v2038 = vunpack.c.l.b16 %v1404
      %v2039 = vunpack.c.h.b16 %v1404
      %v2040 = vunpack.c.l.b16 %v1405
      %v2041 = vunpack.c.h.b16 %v1405
      %v2042 = vunpack.c.l.b16 %v1406
      %v2043 = vunpack.c.h.b16 %v1406
      %v2044 = vunpack.c.l.b16 %v1407
      %v2045 = vunpack.c.h.b16 %v1407
      %v2046 = vunpack.c.l.b16 %v1408
      %v2047 = vunpack.c.h.b16 %v1408
      %v2048 = vunpack.c.l.b16 %v1409
      %v2049 = vunpack.c.h.b16 %v1409
      %v2050 = vunpack.c.l.b16 %v1410
      %v2051 = vunpack.c.h.b16 %v1410
      %v2052 = vunpack.c.l.b16 %v1411
      %v2053 = vunpack.c.h.b16 %v1411
      %v2054 = vunpack.c.l.b16 %v1412
      %v2055 = vunpack.c.h.b16 %v1412
      %v2056 = vunpack.c.l.b16 %v1413
      %v2057 = vunpack.c.h.b16 %v1413
      %v2058 = vunpack.c.l.b16 %v1414
      %v2059 = vunpack.c.h.b16 %v1414
      %v2060 = vunpack.c.l.b16 %v1415
      %v2061 = vunpack.c.h.b16 %v1415
      %v2062 = vunpack.c.l.b16 %v1416
      %v2063 = vunpack.c.h.b16 %v1416
      %v2064 = vunpack.c.l.b16 %v1417
      %v2065 = vunpack.c.h.b16 %v1417
      %v2066 = vunpack.c.l.b16 %v1418
      %v2067 = vunpack.c.h.b16 %v1418
      %v2068 = vunpack.c.l.b16 %v1419
      %v2069 = vunpack.c.h.b16 %v1419
      %v2070 = vunpack.c.l.b16 %v1420
      %v2071 = vunpack.c.h.b16 %v1420
      %v2072 = vunpack.c.l.b16 %v1421
      %v2073 = vunpack.c.h.b16 %v1421
      %v2074 = vunpack.c.l.b16 %v1422
      %v2075 = vunpack.c.h.b16 %v1422
      %v2076 = vunpack.c.l.b16 %v1423
      %v2077 = vunpack.c.h.b16 %v1423
      %v2078 = vunpack.c.l.b16 %v1424
      %v2079 = vunpack.c.h.b16 %v1424
      %v2080 = vunpack.c.l.b16 %v1425
      %v2081 = vunpack.c.h.b16 %v1425
      %v2082 = vunpack.c.l.b16 %v1426
      %v2083 = vunpack.c.h.b16 %v1426
      %v2084 = vunpack.c.l.b16 %v1427
      %v2085 = vunpack.c.h.b16 %v1427
      %v2086 = vunpack.c.l.b16 %v1428
      %v2087 = vunpack.c.h.b16 %v1428
      %v2088 = vunpack.c.l.b16 %v1429
      %v2089 = vunpack.c.h.b16 %v1429
      %v2090 = vunpack.c.l.b16 %v1430
      %v2091 = vunpack.c.h.b16 %v1430
      %v2092 = vunpack.c.l.b16 %v1431
      %v2093 = vunpack.c.h.b16 %v1431
      %v2094 = vunpack.c.l.b16 %v1432
      %v2095 = vunpack.c.h.b16 %v1432
      %v2096 = vunpack.c.l.b16 %v1433
      %v2097 = vunpack.c.h.b16 %v1433
      %v2098 = vunpack.c.l.b16 %v1434
      %v2099 = vunpack.c.h.b16 %v1434
      %v2100 = vunpack.c.l.b16 %v1435
      %v2101 = vunpack.c.h.b16 %v1435
      %v2102 = vunpack.c.l.b16 %v1436
      %v2103 = vunpack.c.h.b16 %v1436
      %v2104 = vunpack.c.l.b16 %v1437
      %v2105 = vunpack.c.h.b16 %v1437
      %v2106 = vunpack.c.l.b16 %v1438
      %v2107 = vunpack.c.h.b16 %v1438
      %v2108 = vunpack.c.l.b16 %v1439
      %v2109 = vunpack.c.h.b16 %v1439
      %v2110 = vunpack.c.l.b16 %v1440
      %v2111 = vunpack.c.h.b16 %v1440
      %v2112 = vunpack.c.l.b16 %v1441
      %v2113 = vunpack.c.h.b16 %v1441
      %v2114 = vunpack.c.l.b16 %v1442
      %v2115 = vunpack.c.h.b16 %v1442
      %v2116 = vunpack.c.l.b16 %v1443
      %v2117 = vunpack.c.h.b16 %v1443
      %v2118 = vunpack.c.l.b16 %v1444
      %v2119 = vunpack.c.h.b16 %v1444
      %v2120 = vunpack.c.l.b16 %v1445
      %v2121 = vunpack.c.h.b16 %v1445
      %v2122 = vunpack.c.l.b16 %v1446
      %v2123 = vunpack.c.h.b16 %v1446
      %v2124 = vunpack.c.l.b16 %v1447
      %v2125 = vunpack.c.h.b16 %v1447
      %v2126 = vunpack.c.l.b16 %v1448
      %v2127 = vunpack.c.h.b16 %v1448
      %v2128 = vunpack.c.l.b16 %v1449
      %v2129 = vunpack.c.h.b16 %v1449
      %v2130 = vunpack.c.l.b16 %v1450
      %v2131 = vunpack.c.h.b16 %v1450
      %v2132 = vunpack.c.l.b16 %v1451
      %v2133 = vunpack.c.h.b16 %v1451
      %v2134 = vunpack.c.l.b16 %v1452
      %v2135 = vunpack.c.h.b16 %v1452
      %v2136 = vunpack.c.l.b16 %v1453
      %v2137 = vunpack.c.h.b16 %v1453
      %v2138 = vunpack.c.l.b16 %v1454
      %v2139 = vunpack.c.h.b16 %v1454
      %v2140 = vunpack.c.l.b16 %v1455
      %v2141 = vunpack.c.h.b16 %v1455
      %v2142 = vunpack.c.l.b16 %v1456
      %v2143 = vunpack.c.h.b16 %v1456
      %v2144 = vunpack.c.l.b16 %v1457
      %v2145 = vunpack.c.h.b16 %v1457
      %v2146 = vunpack.c.l.b16 %v1458
      %v2147 = vunpack.c.h.b16 %v1458
      %v2148 = vunpack.c.l.b16 %v1459
      %v2149 = vunpack.c.h.b16 %v1459
      %v2150 = vunpack.c.l.b16 %v1460
      %v2151 = vunpack.c.h.b16 %v1460
      %v2152 = vunpack.c.l.b16 %v1461
      %v2153 = vunpack.c.h.b16 %v1461
      %v2154 = vunpack.c.l.b16 %v1462
      %v2155 = vunpack.c.h.b16 %v1462
      %v2156 = vunpack.c.l.b16 %v1463
      %v2157 = vunpack.c.h.b16 %v1463
      %v2158 = vunpack.c.l.b16 %v1464
      %v2159 = vunpack.c.h.b16 %v1464
      %v2160 = vunpack.c.l.b16 %v1465
      %v2161 = vunpack.c.h.b16 %v1465
      %v2162 = vunpack.c.l.b16 %v1466
      %v2163 = vunpack.c.h.b16 %v1466
      %v2164 = vunpack.c.l.b16 %v1467
      %v2165 = vunpack.c.h.b16 %v1467
      %v2166 = vunpack.c.l.b16 %v1468
      %v2167 = vunpack.c.h.b16 %v1468
      %v2168 = vunpack.c.l.b16 %v1469
      %v2169 = vunpack.c.h.b16 %v1469
      %v2170 = vunpack.c.l.b16 %v1470
      %v2171 = vunpack.c.h.b16 %v1470
      %v2172 = vunpack.c.l.b16 %v1471
      %v2173 = vunpack.c.h.b16 %v1471
      %v2174 = vunpack.c.l.b16 %v1472
      %v2175 = vunpack.c.h.b16 %v1472
      %v2176 = vunpack.c.l.b16 %v1473
      %v2177 = vunpack.c.h.b16 %v1473
      %v2178 = vunpack.c.l.b16 %v1474
      %v2179 = vunpack.c.h.b16 %v1474
      %v2180 = vunpack.c.l.b16 %v1475
      %v2181 = vunpack.c.h.b16 %v1475
      %v2182 = vunpack.c.l.b16 %v1476
      %v2183 = vunpack.c.h.b16 %v1476
      %v2184 = vunpack.c.l.b16 %v1477
      %v2185 = vunpack.c.h.b16 %v1477
      %v2186 = vunpack.c.l.b16 %v1478
      %v2187 = vunpack.c.h.b16 %v1478
      %v2188 = vunpack.c.l.b16 %v1479
      %v2189 = vunpack.c.h.b16 %v1479
      %v2190 = vunpack.c.l.b16 %v1480
      %v2191 = vunpack.c.h.b16 %v1480
      %v2192 = vunpack.c.l.b16 %v1481
      %v2193 = vunpack.c.h.b16 %v1481
      %v2194 = vunpack.c.l.b16 %v1482
      %v2195 = vunpack.c.h.b16 %v1482
      %v2196 = vunpack.c.l.b16 %v1483
      %v2197 = vunpack.c.h.b16 %v1483
      %v2198 = vunpack.c.l.b16 %v1484
      %v2199 = vunpack.c.h.b16 %v1484
      %v2200 = vunpack.c.l.b16 %v1485
      %v2201 = vunpack.c.h.b16 %v1485
      %v2202 = vunpack.c.l.b16 %v1486
      %v2203 = vunpack.c.h.b16 %v1486
      %v2204 = vunpack.c.l.b16 %v1487
      %v2205 = vunpack.c.h.b16 %v1487
      %v2206 = vunpack.c.l.b16 %v1488
      %v2207 = vunpack.c.h.b16 %v1488
      %v2208 = vunpack.c.l.b16 %v1489
      %v2209 = vunpack.c.h.b16 %v1489
      %v2210 = vunpack.c.l.b16 %v1490
      %v2211 = vunpack.c.h.b16 %v1490
      %v2212 = vunpack.c.l.b16 %v1491
      %v2213 = vunpack.c.h.b16 %v1491
      %v2214 = vunpack.c.l.b16 %v1492
      %v2215 = vunpack.c.h.b16 %v1492
      %v2216 = vunpack.c.l.b16 %v1493
      %v2217 = vunpack.c.h.b16 %v1493
      %v2218 = vunpack.c.l.b16 %v1494
      %v2219 = vunpack.c.h.b16 %v1494
      %v2220 = vunpack.c.l.b16 %v1495
      %v2221 = vunpack.c.h.b16 %v1495
      %v2222 = vunpack.c.l.b16 %v1496
      %v2223 = vunpack.c.h.b16 %v1496
      %v2224 = vunpack.c.l.b16 %v1497
      %v2225 = vunpack.c.h.b16 %v1497
      %v2226 = vunpack.c.l.b16 %v1498
      %v2227 = vunpack.c.h.b16 %v1498
      %v2228 = vunpack.c.l.b16 %v1499
      %v2229 = vunpack.c.h.b16 %v1499
      %v2230 = vunpack.c.l.b16 %v1500
      %v2231 = vunpack.c.h.b16 %v1500
      %v2232 = vunpack.c.l.b16 %v1501
      %v2233 = vunpack.c.h.b16 %v1501
      %v2234 = vunpack.c.l.b16 %v1502
      %v2235 = vunpack.c.h.b16 %v1502
      %v2236 = vunpack.c.l.b16 %v1503
      %v2237 = vunpack.c.h.b16 %v1503
      %v2238 = vunpack.c.l.b16 %v1504
      %v2239 = vunpack.c.h.b16 %v1504
      %v2240 = vunpack.c.l.b16 %v1505
      %v2241 = vunpack.c.h.b16 %v1505
      %v2242 = vunpack.c.l.b16 %v1506
      %v2243 = vunpack.c.h.b16 %v1506
      %v2244 = vunpack.c.l.b16 %v1507
      %v2245 = vunpack.c.h.b16 %v1507
      %v2246 = vunpack.c.l.b16 %v1508
      %v2247 = vunpack.c.h.b16 %v1508
      %v2248 = vunpack.c.l.b16 %v1509
      %v2249 = vunpack.c.h.b16 %v1509
      %v2250 = vunpack.c.l.b16 %v1510
      %v2251 = vunpack.c.h.b16 %v1510
      %v2252 = vunpack.c.l.b16 %v1511
      %v2253 = vunpack.c.h.b16 %v1511
      %v2254 = vunpack.c.l.b16 %v1512
      %v2255 = vunpack.c.h.b16 %v1512
      %v2256 = vunpack.c.l.b16 %v1513
      %v2257 = vunpack.c.h.b16 %v1513
      %v2258 = vunpack.c.l.b16 %v1514
      %v2259 = vunpack.c.h.b16 %v1514
      %v2260 = vunpack.c.l.b16 %v1515
      %v2261 = vunpack.c.h.b16 %v1515
      %v2262 = vunpack.c.l.b16 %v1516
      %v2263 = vunpack.c.h.b16 %v1516
      %v2264 = vunpack.c.l.b16 %v1517
      %v2265 = vunpack.c.h.b16 %v1517
      %v2266 = vunpack.c.l.b16 %v1518
      %v2267 = vunpack.c.h.b16 %v1518
      %v2268 = vunpack.c.l.b16 %v1519
      %v2269 = vunpack.c.h.b16 %v1519
      %v2270 = vunpack.c.l.b16 %v1520
      %v2271 = vunpack.c.h.b16 %v1520
      %v2272 = vunpack.c.l.b16 %v1521
      %v2273 = vunpack.c.h.b16 %v1521
      %v2274 = vunpack.c.l.b16 %v1522
      %v2275 = vunpack.c.h.b16 %v1522
      %v2276 = vunpack.c.l.b16 %v1523
      %v2277 = vunpack.c.h.b16 %v1523
      %v2278 = vunpack.c.l.b16 %v1524
      %v2279 = vunpack.c.h.b16 %v1524
      %v2280 = vunpack.c.l.b16 %v1525
      %v2281 = vunpack.c.h.b16 %v1525
      %v2282 = vunpack.c.l.b16 %v1526
      %v2283 = vunpack.c.h.b16 %v1526
      %v2284 = vunpack.c.l.b16 %v1527
      %v2285 = vunpack.c.h.b16 %v1527
      %v2286 = vunpack.c.l.b16 %v1528
      %v2287 = vunpack.c.h.b16 %v1528
      %v2288 = vunpack.c.l.b16 %v1529
      %v2289 = vunpack.c.h.b16 %v1529
      %v2290 = vunpack.c.l.b16 %v1530
      %v2291 = vunpack.c.h.b16 %v1530
      %v2292 = vunpack.c.l.b16 %v1531
      %v2293 = vunpack.c.h.b16 %v1531
      %v2294 = vunpack.c.l.b16 %v1532
      %v2295 = vunpack.c.h.b16 %v1532
      %v2296 = vunpack.c.l.b16 %v1533
      %v2297 = vunpack.c.h.b16 %v1533
      %v2298 = vunpack.c.l.b16 %v1534
      %v2299 = vunpack.c.h.b16 %v1534
      %v2300 = vunpack.c.l.b16 %v1535
      %v2301 = vunpack.c.h.b16 %v1535
      %v2302 = vunpack.c.l.b16 %v1536
      %v2303 = vunpack.c.h.b16 %v1536
      %v2304 = vunpack.c.l.b16 %v1537
      %v2305 = vunpack.c.h.b16 %v1537
      %v2306 = vunpack.c.l.b16 %v1538
      %v2307 = vunpack.c.h.b16 %v1538
      %v2308 = vunpack.c.l.b16 %v1539
      %v2309 = vunpack.c.h.b16 %v1539
      %v2310 = vunpack.c.l.b16 %v1540
      %v2311 = vunpack.c.h.b16 %v1540
      %v2312 = vunpack.c.l.b16 %v1541
      %v2313 = vunpack.c.h.b16 %v1541
      %v2314 = vunpack.c.l.b16 %v1542
      %v2315 = vunpack.c.h.b16 %v1542
      %v2316 = vunpack.c.l.b16 %v1543
      %v2317 = vunpack.c.h.b16 %v1543
      %v2318 = vunpack.c.l.b16 %v1544
      %v2319 = vunpack.c.h.b16 %v1544
      %v2320 = vunpack.c.l.b16 %v1545
      %v2321 = vunpack.c.h.b16 %v1545
      %v2322 = vunpack.c.l.b16 %v1546
      %v2323 = vunpack.c.h.b16 %v1546
      %v2324 = vunpack.c.l.b16 %v1547
      %v2325 = vunpack.c.h.b16 %v1547
      %v2326 = vunpack.c.l.b16 %v1548
      %v2327 = vunpack.c.h.b16 %v1548
      %v2328 = vunpack.c.l.b16 %v1549
      %v2329 = vunpack.c.h.b16 %v1549
      %v2330 = vunpack.c.l.b16 %v1550
      %v2331 = vunpack.c.h.b16 %v1550
      %v2332 = vunpack.c.l.b16 %v1551
      %v2333 = vunpack.c.h.b16 %v1551
      %v2334 = vunpack.c.l.b16 %v1552
      %v2335 = vunpack.c.h.b16 %v1552
      %v2336 = vunpack.c.l.b16 %v1553
      %v2337 = vunpack.c.h.b16 %v1553
      %v2338 = vunpack.c.l.b16 %v1554
      %v2339 = vunpack.c.h.b16 %v1554
      %v2340 = vunpack.c.l.b16 %v1555
      %v2341 = vunpack.c.h.b16 %v1555
      %v2342 = vunpack.c.l.b16 %v1556
      %v2343 = vunpack.c.h.b16 %v1556
      %v2344 = vunpack.c.l.b16 %v1557
      %v2345 = vunpack.c.h.b16 %v1557
      %v2346 = vunpack.c.l.b16 %v1558
      %v2347 = vunpack.c.h.b16 %v1558
      %v2348 = vunpack.c.l.b16 %v1559
      %v2349 = vunpack.c.h.b16 %v1559
      %v2350 = vpack.c.b16 %v1842, %v1838
      %v2351 = vpack.c.b16 %v1843, %v1839
      %v2352 = vpack.c.b16 %v1844, %v1840
      %v2353 = vpack.c.b16 %v1845, %v1841
      %v2354 = vpack.c.b16 %v1850, %v1846
      %v2355 = vpack.c.b16 %v1851, %v1847
      %v2356 = vpack.c.b16 %v1852, %v1848
      %v2357 = vpack.c.b16 %v1853, %v1849
      %v2358 = vpack.c.b16 %v1858, %v1854
      %v2359 = vpack.c.b16 %v1859, %v1855
      %v2360 = vpack.c.b16 %v1860, %v1856
      %v2361 = vpack.c.b16 %v1861, %v1857
      %v2362 = vpack.c.b16 %v1866, %v1862
      %v2363 = vpack.c.b16 %v1867, %v1863
      %v2364 = vpack.c.b16 %v1868, %v1864
      %v2365 = vpack.c.b16 %v1869, %v1865
      %v2366 = vpack.c.b16 %v1874, %v1870
      %v2367 = vpack.c.b16 %v1875, %v1871
      %v2368 = vpack.c.b16 %v1876, %v1872
      %v2369 = vpack.c.b16 %v1877, %v1873
      %v2370 = vpack.c.b16 %v1882, %v1878
      %v2371 = vpack.c.b16 %v1883, %v1879
      %v2372 = vpack.c.b16 %v1884, %v1880
      %v2373 = vpack.c.b16 %v1885, %v1881
      %v2374 = vpack.c.b16 %v1890, %v1886
      %v2375 = vpack.c.b16 %v1891, %v1887
      %v2376 = vpack.c.b16 %v1892, %v1888
      %v2377 = vpack.c.b16 %v1893, %v1889
      %v2378 = vpack.c.b16 %v1898, %v1894
      %v2379 = vpack.c.b16 %v1899, %v1895
      %v2380 = vpack.c.b16 %v1900, %v1896
      %v2381 = vpack.c.b16 %v1901, %v1897
      %v2382 = vpack.c.b16 %v1906, %v1902
      %v2383 = vpack.c.b16 %v1907, %v1903
      %v2384 = vpack.c.b16 %v1908, %v1904
      %v2385 = vpack.c.b16 %v1909, %v1905
      %v2386 = vpack.c.b16 %v1914, %v1910
      %v2387 = vpack.c.b16 %v1915, %v1911
      %v2388 = vpack.c.b16 %v1916, %v1912
      %v2389 = vpack.c.b16 %v1917, %v1913
      %v2390 = vpack.c.b16 %v1922, %v1918
      %v2391 = vpack.c.b16 %v1923, %v1919
      %v2392 = vpack.c.b16 %v1924, %v1920
      %v2393 = vpack.c.b16 %v1925, %v1921
      %v2394 = vpack.c.b16 %v1930, %v1926
      %v2395 = vpack.c.b16 %v1931, %v1927
      %v2396 = vpack.c.b16 %v1932, %v1928
      %v2397 = vpack.c.b16 %v1933, %v1929
      %v2398 = vpack.c.b16 %v1938, %v1934
      %v2399 = vpack.c.b16 %v1939, %v1935
      %v2400 = vpack.c.b16 %v1940, %v1936
      %v2401 = vpack.c.b16 %v1941, %v1937
      %v2402 = vpack.c.b16 %v1946, %v1942
      %v2403 = vpack.c.b16 %v1947, %v1943
      %v2404 = vpack.c.b16 %v1948, %v1944
      %v2405 = vpack.c.b16 %v1949, %v1945
      %v2406 = vpack.c.b16 %v1954, %v1950
      %v2407 = vpack.c.b16 %v1955, %v1951
      %v2408 = vpack.c.b16 %v1956, %v1952
      %v2409 = vpack.c.b16 %v1957, %v1953
      %v2410 = vpack.c.b16 %v1962, %v1958
      %v2411 = vpack.c.b16 %v1963, %v1959
      %v2412 = vpack.c.b16 %v1964, %v1960
      %v2413 = vpack.c.b16 %v1965, %v1961
      %v2414 = vpack.c.b16 %v1970, %v1966
      %v2415 = vpack.c.b16 %v1971, %v1967
      %v2416 = vpack.c.b16 %v1972, %v1968
      %v2417 = vpack.c.b16 %v1973, %v1969
      %v2418 = vpack.c.b16 %v1978, %v1974
      %v2419 = vpack.c.b16 %v1979, %v1975
      %v2420 = vpack.c.b16 %v1980, %v1976
      %v2421 = vpack.c.b16 %v1981, %v1977
      %v2422 = vpack.c.b16 %v1986, %v1982
      %v2423 = vpack.c.b16 %v1987, %v1983
      %v2424 = vpack.c.b16 %v1988, %v1984
      %v2425 = vpack.c.b16 %v1989, %v1985
      %v2426 = vpack.c.b16 %v1994, %v1990
      %v2427 = vpack.c.b16 %v1995, %v1991
      %v2428 = vpack.c.b16 %v1996, %v1992
      %v2429 = vpack.c.b16 %v1997, %v1993
      %v2430 = vpack.c.b16 %v2002, %v1998
      %v2431 = vpack.c.b16 %v2003, %v1999
      %v2432 = vpack.c.b16 %v2004, %v2000
      %v2433 = vpack.c.b16 %v2005, %v2001
      %v2434 = vpack.c.b16 %v2010, %v2006
      %v2435 = vpack.c.b16 %v2011, %v2007
      %v2436 = vpack.c.b16 %v2012, %v2008
      %v2437 = vpack.c.b16 %v2013, %v2009
      %v2438 = vpack.c.b16 %v2018, %v2014
      %v2439 = vpack.c.b16 %v2019, %v2015
      %v2440 = vpack.c.b16 %v2020, %v2016
      %v2441 = vpack.c.b16 %v2021, %v2017
      %v2442 = vpack.c.b16 %v2026, %v2022
      %v2443 = vpack.c.b16 %v2027, %v2023
      %v2444 = vpack.c.b16 %v2028, %v2024
      %v2445 = vpack.c.b16 %v2029, %v2025
      %v2446 = vpack.c.b16 %v2034, %v2030
      %v2447 = vpack.c.b16 %v2035, %v2031
      %v2448 = vpack.c.b16 %v2036, %v2032
      %v2449 = vpack.c.b16 %v2037, %v2033
      %v2450 = vpack.c.b16 %v2042, %v2038
      %v2451 = vpack.c.b16 %v2043, %v2039
      %v2452 = vpack.c.b16 %v2044, %v2040
      %v2453 = vpack.c.b16 %v2045, %v2041
      %v2454 = vpack.c.b16 %v2050, %v2046
      %v2455 = vpack.c.b16 %v2051, %v2047
      %v2456 = vpack.c.b16 %v2052, %v2048
      %v2457 = vpack.c.b16 %v2053, %v2049
      %v2458 = vpack.c.b16 %v2058, %v2054
      %v2459 = vpack.c.b16 %v2059, %v2055
      %v2460 = vpack.c.b16 %v2060, %v2056
      %v2461 = vpack.c.b16 %v2061, %v2057
      %v2462 = vpack.c.b16 %v2066, %v2062
      %v2463 = vpack.c.b16 %v2067, %v2063
      %v2464 = vpack.c.b16 %v2068, %v2064
      %v2465 = vpack.c.b16 %v2069, %v2065
      %v2466 = vpack.c.b16 %v2074, %v2070
      %v2467 = vpack.c.b16 %v2075, %v2071
      %v2468 = vpack.c.b16 %v2076, %v2072
      %v2469 = vpack.c.b16 %v2077, %v2073
      %v2470 = vpack.c.b16 %v2082, %v2078
      %v2471 = vpack.c.b16 %v2083, %v2079
      %v2472 = vpack.c.b16 %v2084, %v2080
      %v2473 = vpack.c.b16 %v2085, %v2081
      %v2474 = vpack.c.b16 %v2090, %v2086
      %v2475 = vpack.c.b16 %v2091, %v2087
      %v2476 = vpack.c.b16 %v2092, %v2088
      %v2477 = vpack.c.b16 %v2093, %v2089
      %v2478 = vpack.c.b16 %v2098, %v2094
      %v2479 = vpack.c.b16 %v2099, %v2095
      %v2480 = vpack.c.b16 %v2100, %v2096
      %v2481 = vpack.c.b16 %v2101, %v2097
      %v2482 = vpack.c.b16 %v2106, %v2102
      %v2483 = vpack.c.b16 %v2107, %v2103
      %v2484 = vpack.c.b16 %v2108, %v2104
      %v2485 = vpack.c.b16 %v2109, %v2105
      %v2486 = vpack.c.b16 %v2114, %v2110
      %v2487 = vpack.c.b16 %v2115, %v2111
      %v2488 = vpack.c.b16 %v2116, %v2112
      %v2489 = vpack.c.b16 %v2117, %v2113
      %v2490 = vpack.c.b16 %v2122, %v2118
      %v2491 = vpack.c.b16 %v2123, %v2119
      %v2492 = vpack.c.b16 %v2124, %v2120
      %v2493 = vpack.c.b16 %v2125, %v2121
      %v2494 = vpack.c.b16 %v2130, %v2126
      %v2495 = vpack.c.b16 %v2131, %v2127
      %v2496 = vpack.c.b16 %v2132, %v2128
      %v2497 = vpack.c.b16 %v2133, %v2129
      %v2498 = vpack.c.b16 %v2138, %v2134
      %v2499 = vpack.c.b16 %v2139, %v2135
      %v2500 = vpack.c.b16 %v2140, %v2136
      %v2501 = vpack.c.b16 %v2141, %v2137
      %v2502 = vpack.c.b16 %v2146, %v2142
      %v2503 = vpack.c.b16 %v2147, %v2143
      %v2504 = vpack.c.b16 %v2148, %v2144
      %v2505 = vpack.c.b16 %v2149, %v2145
      %v2506 = vpack.c.b16 %v2154, %v2150
      %v2507 = vpack.c.b16 %v2155, %v2151
      %v2508 = vpack.c.b16 %v2156, %v2152
      %v2509 = vpack.c.b16 %v2157, %v2153
      %v2510 = vpack.c.b16 %v2162, %v2158
      %v2511 = vpack.c.b16 %v2163, %v2159
      %v2512 = vpack.c.b16 %v2164, %v2160
      %v2513 = vpack.c.b16 %v2165, %v2161
      %v2514 = vpack.c.b16 %v2170, %v2166
      %v2515 = vpack.c.b16 %v2171, %v2167
      %v2516 = vpack.c.b16 %v2172, %v2168
      %v2517 = vpack.c.b16 %v2173, %v2169
      %v2518 = vpack.c.b16 %v2178, %v2174
      %v2519 = vpack.c.b16 %v2179, %v2175
      %v2520 = vpack.c.b16 %v2180, %v2176
      %v2521 = vpack.c.b16 %v2181, %v2177
      %v2522 = vpack.c.b16 %v2186, %v2182
      %v2523 = vpack.c.b16 %v2187, %v2183
      %v2524 = vpack.c.b16 %v2188, %v2184
      %v2525 = vpack.c.b16 %v2189, %v2185
      %v2526 = vpack.c.b16 %v2194, %v2190
      %v2527 = vpack.c.b16 %v2195, %v2191
      %v2528 = vpack.c.b16 %v2196, %v2192
      %v2529 = vpack.c.b16 %v2197, %v2193
      %v2530 = vpack.c.b16 %v2202, %v2198
      %v2531 = vpack.c.b16 %v2203, %v2199
      %v2532 = vpack.c.b16 %v2204, %v2200
      %v2533 = vpack.c.b16 %v2205, %v2201
      %v2534 = vpack.c.b16 %v2210, %v2206
      %v2535 = vpack.c.b16 %v2211, %v2207
      %v2536 = vpack.c.b16 %v2212, %v2208
      %v2537 = vpack.c.b16 %v2213, %v2209
      %v2538 = vpack.c.b16 %v2218, %v2214
      %v2539 = vpack.c.b16 %v2219, %v2215
      %v2540 = vpack.c.b16 %v2220, %v2216
      %v2541 = vpack.c.b16 %v2221, %v2217
      %v2542 = vpack.c.b16 %v2226, %v2222
      %v2543 = vpack.c.b16 %v2227, %v2223
      %v2544 = vpack.c.b16 %v2228, %v2224
      %v2545 = vpack.c.b16 %v2229, %v2225
      %v2546 = vpack.c.b16 %v2234, %v2230
      %v2547 = vpack.c.b16 %v2235, %v2231
      %v2548 = vpack.c.b16 %v2236, %v2232
      %v2549 = vpack.c.b16 %v2237, %v2233
      %v2550 = vpack.c.b16 %v2242, %v2238
      %v2551 = vpack.c.b16 %v2243, %v2239
      %v2552 = vpack.c.b16 %v2244, %v2240
      %v2553 = vpack.c.b16 %v2245, %v2241
      %v2554 = vpack.c.b16 %v2250, %v2246
      %v2555 = vpack.c.b16 %v2251, %v2247
      %v2556 = vpack.c.b16 %v2252, %v2248
      %v2557 = vpack.c.b16 %v2253, %v2249
      %v2558 = vpack.c.b16 %v2258, %v2254
      %v2559 = vpack.c.b16 %v2259, %v2255
      %v2560 = vpack.c.b16 %v2260, %v2256
      %v2561 = vpack.c.b16 %v2261, %v2257
      %v2562 = vpack.c.b16 %v2266, %v2262
      %v2563 = vpack.c.b16 %v2267, %v2263
      %v2564 = vpack.c.b16 %v2268, %v2264
      %v2565 = vpack.c.b16 %v2269, %v2265
      %v2566 = vpack.c.b16 %v2274, %v2270
      %v2567 = vpack.c.b16 %v2275, %v2271
      %v2568 = vpack.c.b16 %v2276, %v2272
      %v2569 = vpack.c.b16 %v2277, %v2273
      %v2570 = vpack.c.b16 %v2282, %v2278
      %v2571 = vpack.c.b16 %v2283, %v2279
      %v2572 = vpack.c.b16 %v2284, %v2280
      %v2573 = vpack.c.b16 %v2285, %v2281
      %v2574 = vpack.c.b16 %v2290, %v2286
      %v2575 = vpack.c.b16 %v2291, %v2287
      %v2576 = vpack.c.b16 %v2292, %v2288
      %v2577 = vpack.c.b16 %v2293, %v2289
      %v2578 = vpack.c.b16 %v2298, %v2294
      %v2579 = vpack.c.b16 %v2299, %v2295
      %v2580 = vpack.c.b16 %v2300, %v2296
      %v2581 = vpack.c.b16 %v2301, %v2297
      %v2582 = vpack.c.b16 %v2306, %v2302
      %v2583 = vpack.c.b16 %v2307, %v2303
      %v2584 = vpack.c.b16 %v2308, %v2304
      %v2585 = vpack.c.b16 %v2309, %v2305
      %v2586 = vpack.c.b16 %v2314, %v2310
      %v2587 = vpack.c.b16 %v2315, %v2311
      %v2588 = vpack.c.b16 %v2316, %v2312
      %v2589 = vpack.c.b16 %v2317, %v2313
      %v2590 = vpack.c.b16 %v2322, %v2318
      %v2591 = vpack.c.b16 %v2323, %v2319
      %v2592 = vpack.c.b16 %v2324, %v2320
      %v2593 = vpack.c.b16 %v2325, %v2321
      %v2594 = vpack.c.b16 %v2330, %v2326
      %v2595 = vpack.c.b16 %v2331, %v2327
      %v2596 = vpack.c.b16 %v2332, %v2328
      %v2597 = vpack.c.b16 %v2333, %v2329
      %v2598 = vpack.c.b16 %v2338, %v2334
      %v2599 = vpack.c.b16 %v2339, %v2335
      %v2600 = vpack.c.b16 %v2340, %v2336
      %v2601 = vpack.c.b16 %v2341, %v2337
      %v2602 = vpack.c.b16 %v2346, %v2342
      %v2603 = vpack.c.b16 %v2347, %v2343
      %v2604 = vpack.c.b16 %v2348, %v2344
      %v2605 = vpack.c.b16 %v2349, %v2345
      %2862 = vmatprep.subr.bf16.mxu0 %v2379
      %2863 = vmatpush1.bf16.msra.mxu0 %v2378
      %2864 = vmatprep.subr.bf16.mxu0 %v2375
      %2865 = vmatpush1.bf16.msra.mxu0 %v2374
      %2866 = vmatprep.subr.bf16.mxu0 %v2371
      %2867 = vmatpush1.bf16.msra.mxu0 %v2370
      %2868 = vmatprep.subr.bf16.mxu0 %v2367
      %2869 = vmatpush1.bf16.msra.mxu0 %v2366
      %2870 = vmatprep.subr.bf16.mxu0 %v2363
      %2871 = vmatpush1.bf16.msra.mxu0 %v2362
      %2872 = vmatprep.subr.bf16.mxu0 %v2359
      %2873 = vmatpush1.bf16.msra.mxu0 %v2358
      %2874 = vmatprep.subr.bf16.mxu0 %v2355
      %2875 = vmatpush1.bf16.msra.mxu0 %v2354
      %2876 = vmatprep.subr.bf16.mxu0 %v2351
      %2877 = vmatpush1.bf16.msra.mxu0 %v2350
      %2878 = vmatprep.subr.bf16.mxu0 %v2411
      %2879 = vmatpush2.bf16.msra.mxu0 %v2410
      %2880 = vmatprep.subr.bf16.mxu0 %v2407
      %2881 = vmatpush2.bf16.msra.mxu0 %v2406
      %2882 = vmatprep.subr.bf16.mxu0 %v2403
      %2883 = vmatpush2.bf16.msra.mxu0 %v2402
      %2884 = vmatprep.subr.bf16.mxu0 %v2399
      %2885 = vmatpush2.bf16.msra.mxu0 %v2398
      %2886 = vmatprep.subr.bf16.mxu0 %v2395
      %2887 = vmatpush2.bf16.msra.mxu0 %v2394
      %2888 = vmatprep.subr.bf16.mxu0 %v2391
      %2889 = vmatpush2.bf16.msra.mxu0 %v2390
      %2890 = vmatprep.subr.bf16.mxu0 %v2387
      %2891 = vmatpush2.bf16.msra.mxu0 %v2386
      %2892 = vmatprep.subr.bf16.mxu0 %v2383
      %2893 = vmatpush2.bf16.msra.mxu0 %v2382
      %2894 = vmatprep.mubr.bf16.mxu0 %v1297
      %2895 = vmatmul.mubr.bf16.gmra.mxu0 %v1296
      %v2896 = vpop.f32.mrf.mxu0
      %v2897 = vadd.f32 %v1565, %v2896
      %v2898 = vpop.f32.mrf.mxu0
      %v2899 = vadd.f32 %v1569, %v2898
      %v2900 = vpop.f32.mrf.mxu0
      %v2901 = vadd.f32 %v1565, %v2900
      %v2902 = vpop.f32.mrf.mxu0
      %v2903 = vadd.f32 %v1569, %v2902
      %2904 = vdwg.mxu0
      %2905 = vmatprep.subr.bf16.mxu0 %v2443
      %2906 = vmatpush1.bf16.msra.mxu0 %v2442
      %2907 = vmatprep.subr.bf16.mxu0 %v2439
      %2908 = vmatpush1.bf16.msra.mxu0 %v2438
      %2909 = vmatprep.subr.bf16.mxu0 %v2435
      %2910 = vmatpush1.bf16.msra.mxu0 %v2434
      %2911 = vmatprep.subr.bf16.mxu0 %v2431
      %2912 = vmatpush1.bf16.msra.mxu0 %v2430
      %2913 = vmatprep.subr.bf16.mxu0 %v2427
      %2914 = vmatpush1.bf16.msra.mxu0 %v2426
      %2915 = vmatprep.subr.bf16.mxu0 %v2423
      %2916 = vmatpush1.bf16.msra.mxu0 %v2422
      %2917 = vmatprep.subr.bf16.mxu0 %v2419
      %2918 = vmatpush1.bf16.msra.mxu0 %v2418
      %2919 = vmatprep.subr.bf16.mxu0 %v2415
      %2920 = vmatpush1.bf16.msra.mxu0 %v2414
      %2921 = vmatprep.subr.bf16.mxu0 %v2475
      %2922 = vmatpush2.bf16.msra.mxu0 %v2474
      %2923 = vmatprep.subr.bf16.mxu0 %v2471
      %2924 = vmatpush2.bf16.msra.mxu0 %v2470
      %2925 = vmatprep.subr.bf16.mxu0 %v2467
      %2926 = vmatpush2.bf16.msra.mxu0 %v2466
      %2927 = vmatprep.subr.bf16.mxu0 %v2463
      %2928 = vmatpush2.bf16.msra.mxu0 %v2462
      %2929 = vmatprep.subr.bf16.mxu0 %v2459
      %2930 = vmatpush2.bf16.msra.mxu0 %v2458
      %2931 = vmatprep.subr.bf16.mxu0 %v2455
      %2932 = vmatpush2.bf16.msra.mxu0 %v2454
      %2933 = vmatprep.subr.bf16.mxu0 %v2451
      %2934 = vmatpush2.bf16.msra.mxu0 %v2450
      %2935 = vmatprep.subr.bf16.mxu0 %v2447
      %2936 = vmatpush2.bf16.msra.mxu0 %v2446
      %2937 = vmatprep.mubr.bf16.mxu0 %v1299
      %2938 = vmatmul.mubr.bf16.gmra.mxu0 %v1298
      %v2939 = vpop.f32.mrf.mxu0
      %v2940 = vadd.f32 %v2897, %v2939
      %v2941 = vpop.f32.mrf.mxu0
      %v2942 = vadd.f32 %v2899, %v2941
      %v2943 = vpop.f32.mrf.mxu0
      %v2944 = vadd.f32 %v2901, %v2943
      %v2945 = vpop.f32.mrf.mxu0
      %v2946 = vadd.f32 %v2903, %v2945
      %2947 = vdwg.mxu0
      %2948 = vmatprep.subr.bf16.mxu0 %v2507
      %2949 = vmatpush1.bf16.msra.mxu0 %v2506
      %2950 = vmatprep.subr.bf16.mxu0 %v2503
      %2951 = vmatpush1.bf16.msra.mxu0 %v2502
      %2952 = vmatprep.subr.bf16.mxu0 %v2499
      %2953 = vmatpush1.bf16.msra.mxu0 %v2498
      %2954 = vmatprep.subr.bf16.mxu0 %v2495
      %2955 = vmatpush1.bf16.msra.mxu0 %v2494
      %2956 = vmatprep.subr.bf16.mxu0 %v2491
      %2957 = vmatpush1.bf16.msra.mxu0 %v2490
      %2958 = vmatprep.subr.bf16.mxu0 %v2487
      %2959 = vmatpush1.bf16.msra.mxu0 %v2486
      %2960 = vmatprep.subr.bf16.mxu0 %v2483
      %2961 = vmatpush1.bf16.msra.mxu0 %v2482
      %2962 = vmatprep.subr.bf16.mxu0 %v2479
      %2963 = vmatpush1.bf16.msra.mxu0 %v2478
      %2964 = vmatprep.subr.bf16.mxu0 %v2539
      %2965 = vmatpush2.bf16.msra.mxu0 %v2538
      %2966 = vmatprep.subr.bf16.mxu0 %v2535
      %2967 = vmatpush2.bf16.msra.mxu0 %v2534
      %2968 = vmatprep.subr.bf16.mxu0 %v2531
      %2969 = vmatpush2.bf16.msra.mxu0 %v2530
      %2970 = vmatprep.subr.bf16.mxu0 %v2527
      %2971 = vmatpush2.bf16.msra.mxu0 %v2526
      %2972 = vmatprep.subr.bf16.mxu0 %v2523
      %2973 = vmatpush2.bf16.msra.mxu0 %v2522
      %2974 = vmatprep.subr.bf16.mxu0 %v2519
      %2975 = vmatpush2.bf16.msra.mxu0 %v2518
      %2976 = vmatprep.subr.bf16.mxu0 %v2515
      %2977 = vmatpush2.bf16.msra.mxu0 %v2514
      %2978 = vmatprep.subr.bf16.mxu0 %v2511
      %2979 = vmatpush2.bf16.msra.mxu0 %v2510
      %2980 = vmatprep.mubr.bf16.mxu0 %v1301
      %2981 = vmatmul.mubr.bf16.gmra.mxu0 %v1300
      %v2982 = vpop.f32.mrf.mxu0
      %v2983 = vadd.f32 %v2940, %v2982
      %v2984 = vpop.f32.mrf.mxu0
      %v2985 = vadd.f32 %v2942, %v2984
      %v2986 = vpop.f32.mrf.mxu0
      %v2987 = vadd.f32 %v2944, %v2986
      %v2988 = vpop.f32.mrf.mxu0
      %v2989 = vadd.f32 %v2946, %v2988
      %2990 = vdwg.mxu0
      %2991 = vmatprep.subr.bf16.mxu0 %v2571
      %2992 = vmatpush1.bf16.msra.mxu0 %v2570
      %2993 = vmatprep.subr.bf16.mxu0 %v2567
      %2994 = vmatpush1.bf16.msra.mxu0 %v2566
      %2995 = vmatprep.subr.bf16.mxu0 %v2563
      %2996 = vmatpush1.bf16.msra.mxu0 %v2562
      %2997 = vmatprep.subr.bf16.mxu0 %v2559
      %2998 = vmatpush1.bf16.msra.mxu0 %v2558
      %2999 = vmatprep.subr.bf16.mxu0 %v2555
      %3000 = vmatpush1.bf16.msra.mxu0 %v2554
      %3001 = vmatprep.subr.bf16.mxu0 %v2551
      %3002 = vmatpush1.bf16.msra.mxu0 %v2550
      %3003 = vmatprep.subr.bf16.mxu0 %v2547
      %3004 = vmatpush1.bf16.msra.mxu0 %v2546
      %3005 = vmatprep.subr.bf16.mxu0 %v2543
      %3006 = vmatpush1.bf16.msra.mxu0 %v2542
      %3007 = vmatprep.subr.bf16.mxu0 %v2603
      %3008 = vmatpush2.bf16.msra.mxu0 %v2602
      %3009 = vmatprep.subr.bf16.mxu0 %v2599
      %3010 = vmatpush2.bf16.msra.mxu0 %v2598
      %3011 = vmatprep.subr.bf16.mxu0 %v2595
      %3012 = vmatpush2.bf16.msra.mxu0 %v2594
      %3013 = vmatprep.subr.bf16.mxu0 %v2591
      %3014 = vmatpush2.bf16.msra.mxu0 %v2590
      %3015 = vmatprep.subr.bf16.mxu0 %v2587
      %3016 = vmatpush2.bf16.msra.mxu0 %v2586
      %3017 = vmatprep.subr.bf16.mxu0 %v2583
      %3018 = vmatpush2.bf16.msra.mxu0 %v2582
      %3019 = vmatprep.subr.bf16.mxu0 %v2579
      %3020 = vmatpush2.bf16.msra.mxu0 %v2578
      %3021 = vmatprep.subr.bf16.mxu0 %v2575
      %3022 = vmatpush2.bf16.msra.mxu0 %v2574
      %3023 = vmatprep.mubr.bf16.mxu0 %v1303
      %3024 = vmatmul.mubr.bf16.gmra.mxu0 %v1302
      %v3025 = vpop.f32.mrf.mxu0
      %v3026 = vadd.f32 %v2983, %v3025
      %v3027 = vpop.f32.mrf.mxu0
      %v3028 = vadd.f32 %v2985, %v3027
      %v3029 = vpop.f32.mrf.mxu0
      %v3030 = vadd.f32 %v2987, %v3029
      %v3031 = vpop.f32.mrf.mxu0
      %v3032 = vadd.f32 %v2989, %v3031
      %3033 = vdwg.mxu0
      %3034 = vmatprep.subr.bf16.mxu0 %v2381
      %3035 = vmatpush1.bf16.msra.mxu0 %v2380
      %3036 = vmatprep.subr.bf16.mxu0 %v2377
      %3037 = vmatpush1.bf16.msra.mxu0 %v2376
      %3038 = vmatprep.subr.bf16.mxu0 %v2373
      %3039 = vmatpush1.bf16.msra.mxu0 %v2372
      %3040 = vmatprep.subr.bf16.mxu0 %v2369
      %3041 = vmatpush1.bf16.msra.mxu0 %v2368
      %3042 = vmatprep.subr.bf16.mxu0 %v2365
      %3043 = vmatpush1.bf16.msra.mxu0 %v2364
      %3044 = vmatprep.subr.bf16.mxu0 %v2361
      %3045 = vmatpush1.bf16.msra.mxu0 %v2360
      %3046 = vmatprep.subr.bf16.mxu0 %v2357
      %3047 = vmatpush1.bf16.msra.mxu0 %v2356
      %3048 = vmatprep.subr.bf16.mxu0 %v2353
      %3049 = vmatpush1.bf16.msra.mxu0 %v2352
      %3050 = vmatprep.subr.bf16.mxu0 %v2413
      %3051 = vmatpush2.bf16.msra.mxu0 %v2412
      %3052 = vmatprep.subr.bf16.mxu0 %v2409
      %3053 = vmatpush2.bf16.msra.mxu0 %v2408
      %3054 = vmatprep.subr.bf16.mxu0 %v2405
      %3055 = vmatpush2.bf16.msra.mxu0 %v2404
      %3056 = vmatprep.subr.bf16.mxu0 %v2401
      %3057 = vmatpush2.bf16.msra.mxu0 %v2400
      %3058 = vmatprep.subr.bf16.mxu0 %v2397
      %3059 = vmatpush2.bf16.msra.mxu0 %v2396
      %3060 = vmatprep.subr.bf16.mxu0 %v2393
      %3061 = vmatpush2.bf16.msra.mxu0 %v2392
      %3062 = vmatprep.subr.bf16.mxu0 %v2389
      %3063 = vmatpush2.bf16.msra.mxu0 %v2388
      %3064 = vmatprep.subr.bf16.mxu0 %v2385
      %3065 = vmatpush2.bf16.msra.mxu0 %v2384
      %3066 = vmatprep.mubr.bf16.mxu0 %v1297
      %3067 = vmatmul.mubr.bf16.gmra.mxu0 %v1296
      %v3068 = vpop.f32.mrf.mxu0
      %v3069 = vadd.f32 %v1573, %v3068
      %v3070 = vpop.f32.mrf.mxu0
      %v3071 = vadd.f32 %v1577, %v3070
      %v3072 = vpop.f32.mrf.mxu0
      %v3073 = vadd.f32 %v1573, %v3072
      %v3074 = vpop.f32.mrf.mxu0
      %v3075 = vadd.f32 %v1577, %v3074
      %3076 = vdwg.mxu0
      %3077 = vmatprep.subr.bf16.mxu0 %v2445
      %3078 = vmatpush1.bf16.msra.mxu0 %v2444
      %3079 = vmatprep.subr.bf16.mxu0 %v2441
      %3080 = vmatpush1.bf16.msra.mxu0 %v2440
      %3081 = vmatprep.subr.bf16.mxu0 %v2437
      %3082 = vmatpush1.bf16.msra.mxu0 %v2436
      %3083 = vmatprep.subr.bf16.mxu0 %v2433
      %3084 = vmatpush1.bf16.msra.mxu0 %v2432
      %3085 = vmatprep.subr.bf16.mxu0 %v2429
      %3086 = vmatpush1.bf16.msra.mxu0 %v2428
      %3087 = vmatprep.subr.bf16.mxu0 %v2425
      %3088 = vmatpush1.bf16.msra.mxu0 %v2424
      %3089 = vmatprep.subr.bf16.mxu0 %v2421
      %3090 = vmatpush1.bf16.msra.mxu0 %v2420
      %3091 = vmatprep.subr.bf16.mxu0 %v2417
      %3092 = vmatpush1.bf16.msra.mxu0 %v2416
      %3093 = vmatprep.subr.bf16.mxu0 %v2477
      %3094 = vmatpush2.bf16.msra.mxu0 %v2476
      %3095 = vmatprep.subr.bf16.mxu0 %v2473
      %3096 = vmatpush2.bf16.msra.mxu0 %v2472
      %3097 = vmatprep.subr.bf16.mxu0 %v2469
      %3098 = vmatpush2.bf16.msra.mxu0 %v2468
      %3099 = vmatprep.subr.bf16.mxu0 %v2465
      %3100 = vmatpush2.bf16.msra.mxu0 %v2464
      %3101 = vmatprep.subr.bf16.mxu0 %v2461
      %3102 = vmatpush2.bf16.msra.mxu0 %v2460
      %3103 = vmatprep.subr.bf16.mxu0 %v2457
      %3104 = vmatpush2.bf16.msra.mxu0 %v2456
      %3105 = vmatprep.subr.bf16.mxu0 %v2453
      %3106 = vmatpush2.bf16.msra.mxu0 %v2452
      %3107 = vmatprep.subr.bf16.mxu0 %v2449
      %3108 = vmatpush2.bf16.msra.mxu0 %v2448
      %3109 = vmatprep.mubr.bf16.mxu0 %v1299
      %3110 = vmatmul.mubr.bf16.gmra.mxu0 %v1298
      %v3111 = vpop.f32.mrf.mxu0
      %v3112 = vadd.f32 %v3069, %v3111
      %v3113 = vpop.f32.mrf.mxu0
      %v3114 = vadd.f32 %v3071, %v3113
      %v3115 = vpop.f32.mrf.mxu0
      %v3116 = vadd.f32 %v3073, %v3115
      %v3117 = vpop.f32.mrf.mxu0
      %v3118 = vadd.f32 %v3075, %v3117
      %3119 = vdwg.mxu0
      %3120 = vmatprep.subr.bf16.mxu0 %v2509
      %3121 = vmatpush1.bf16.msra.mxu0 %v2508
      %3122 = vmatprep.subr.bf16.mxu0 %v2505
      %3123 = vmatpush1.bf16.msra.mxu0 %v2504
      %3124 = vmatprep.subr.bf16.mxu0 %v2501
      %3125 = vmatpush1.bf16.msra.mxu0 %v2500
      %3126 = vmatprep.subr.bf16.mxu0 %v2497
      %3127 = vmatpush1.bf16.msra.mxu0 %v2496
      %3128 = vmatprep.subr.bf16.mxu0 %v2493
      %3129 = vmatpush1.bf16.msra.mxu0 %v2492
      %3130 = vmatprep.subr.bf16.mxu0 %v2489
      %3131 = vmatpush1.bf16.msra.mxu0 %v2488
      %3132 = vmatprep.subr.bf16.mxu0 %v2485
      %3133 = vmatpush1.bf16.msra.mxu0 %v2484
      %3134 = vmatprep.subr.bf16.mxu0 %v2481
      %3135 = vmatpush1.bf16.msra.mxu0 %v2480
      %3136 = vmatprep.subr.bf16.mxu0 %v2541
      %3137 = vmatpush2.bf16.msra.mxu0 %v2540
      %3138 = vmatprep.subr.bf16.mxu0 %v2537
      %3139 = vmatpush2.bf16.msra.mxu0 %v2536
      %3140 = vmatprep.subr.bf16.mxu0 %v2533
      %3141 = vmatpush2.bf16.msra.mxu0 %v2532
      %3142 = vmatprep.subr.bf16.mxu0 %v2529
      %3143 = vmatpush2.bf16.msra.mxu0 %v2528
      %3144 = vmatprep.subr.bf16.mxu0 %v2525
      %3145 = vmatpush2.bf16.msra.mxu0 %v2524
      %3146 = vmatprep.subr.bf16.mxu0 %v2521
      %3147 = vmatpush2.bf16.msra.mxu0 %v2520
      %3148 = vmatprep.subr.bf16.mxu0 %v2517
      %3149 = vmatpush2.bf16.msra.mxu0 %v2516
      %3150 = vmatprep.subr.bf16.mxu0 %v2513
      %3151 = vmatpush2.bf16.msra.mxu0 %v2512
      %3152 = vmatprep.mubr.bf16.mxu0 %v1301
      %3153 = vmatmul.mubr.bf16.gmra.mxu0 %v1300
      %v3154 = vpop.f32.mrf.mxu0
      %v3155 = vadd.f32 %v3112, %v3154
      %v3156 = vpop.f32.mrf.mxu0
      %v3157 = vadd.f32 %v3114, %v3156
      %v3158 = vpop.f32.mrf.mxu0
      %v3159 = vadd.f32 %v3116, %v3158
      %v3160 = vpop.f32.mrf.mxu0
      %v3161 = vadd.f32 %v3118, %v3160
      %3162 = vdwg.mxu0
      %3163 = vmatprep.subr.bf16.mxu0 %v2573
      %3164 = vmatpush1.bf16.msra.mxu0 %v2572
      %3165 = vmatprep.subr.bf16.mxu0 %v2569
      %3166 = vmatpush1.bf16.msra.mxu0 %v2568
      %3167 = vmatprep.subr.bf16.mxu0 %v2565
      %3168 = vmatpush1.bf16.msra.mxu0 %v2564
      %3169 = vmatprep.subr.bf16.mxu0 %v2561
      %3170 = vmatpush1.bf16.msra.mxu0 %v2560
      %3171 = vmatprep.subr.bf16.mxu0 %v2557
      %3172 = vmatpush1.bf16.msra.mxu0 %v2556
      %3173 = vmatprep.subr.bf16.mxu0 %v2553
      %3174 = vmatpush1.bf16.msra.mxu0 %v2552
      %3175 = vmatprep.subr.bf16.mxu0 %v2549
      %3176 = vmatpush1.bf16.msra.mxu0 %v2548
      %3177 = vmatprep.subr.bf16.mxu0 %v2545
      %3178 = vmatpush1.bf16.msra.mxu0 %v2544
      %3179 = vmatprep.subr.bf16.mxu0 %v2605
      %3180 = vmatpush2.bf16.msra.mxu0 %v2604
      %3181 = vmatprep.subr.bf16.mxu0 %v2601
      %3182 = vmatpush2.bf16.msra.mxu0 %v2600
      %3183 = vmatprep.subr.bf16.mxu0 %v2597
      %3184 = vmatpush2.bf16.msra.mxu0 %v2596
      %3185 = vmatprep.subr.bf16.mxu0 %v2593
      %3186 = vmatpush2.bf16.msra.mxu0 %v2592
      %3187 = vmatprep.subr.bf16.mxu0 %v2589
      %3188 = vmatpush2.bf16.msra.mxu0 %v2588
      %3189 = vmatprep.subr.bf16.mxu0 %v2585
      %3190 = vmatpush2.bf16.msra.mxu0 %v2584
      %3191 = vmatprep.subr.bf16.mxu0 %v2581
      %3192 = vmatpush2.bf16.msra.mxu0 %v2580
      %3193 = vmatprep.subr.bf16.mxu0 %v2577
      %3194 = vmatpush2.bf16.msra.mxu0 %v2576
      %3195 = vmatprep.mubr.bf16.mxu0 %v1303
      %3196 = vmatmul.mubr.bf16.gmra.mxu0 %v1302
      %v3197 = vpop.f32.mrf.mxu0
      %v3198 = vadd.f32 %v3155, %v3197
      %v3199 = vpop.f32.mrf.mxu0
      %v3200 = vadd.f32 %v3157, %v3199
      %v3201 = vpop.f32.mrf.mxu0
      %v3202 = vadd.f32 %v3159, %v3201
      %v3203 = vpop.f32.mrf.mxu0
      %v3204 = vadd.f32 %v3161, %v3203
      %3205 = vdwg.mxu0
      %v3206 = vmax.f32 %v3026, 0.0
      %v3207 = vmax.f32 %v3028, 0.0
      %v3208 = vmax.f32 %v3198, 0.0
      %v3209 = vmax.f32 %v3200, 0.0
      %v3210 = vmax.f32 %v3030, 0.0
      %v3211 = vmax.f32 %v3032, 0.0
      %v3212 = vmax.f32 %v3202, 0.0
      %v3213 = vmax.f32 %v3204, 0.0
      %v3214 = vpack.c.bf16 %v3210, %v3206
      %v3215 = vpack.c.bf16 %v3211, %v3207
      %v3216 = vpack.c.bf16 %v3212, %v3208
      %v3217 = vpack.c.bf16 %v3213, %v3209
      %v3218 = vld [vmem:[%s5] sm:$0xf]
      %v3219 = vld [vmem:[%s5 + $0x4] sm:$0xf]
      %v3220 = vld [vmem:[%s5 + $0x8] sm:$0xf]
      %v3221 = vld [vmem:[%s5 + $0xc] sm:$0xf]
      %v3222 = vld [vmem:[%s5 + $0x10] sm:$0xf]
      %v3223 = vld [vmem:[%s5 + $0x14] sm:$0xf]
      %v3224 = vld [vmem:[%s5 + $0x18] sm:$0xf]
      %v3225 = vld [vmem:[%s5 + $0x1c] sm:$0xf]
      %v3226 = vld [vmem:[%s5 + $0x20] sm:$0xf]
      %v3227 = vld [vmem:[%s5 + $0x24] sm:$0xf]
      %v3228 = vld [vmem:[%s5 + $0x28] sm:$0xf]
      %v3229 = vld [vmem:[%s5 + $0x2c] sm:$0xf]
      %v3230 = vld [vmem:[%s5 + $0x30] sm:$0xf]
      %v3231 = vld [vmem:[%s5 + $0x34] sm:$0xf]
      %v3232 = vld [vmem:[%s5 + $0x38] sm:$0xf]
      %v3233 = vld [vmem:[%s5 + $0x3c] sm:$0xf]
      %v3234 = vld [vmem:[%s5 + $0x40] sm:$0xf]
      %v3235 = vld [vmem:[%s5 + $0x44] sm:$0xf]
      %v3236 = vld [vmem:[%s5 + $0x48] sm:$0xf]
      %v3237 = vld [vmem:[%s5 + $0x4c] sm:$0xf]
      %v3238 = vld [vmem:[%s5 + $0x50] sm:$0xf]
      %v3239 = vld [vmem:[%s5 + $0x54] sm:$0xf]
      %v3240 = vld [vmem:[%s5 + $0x58] sm:$0xf]
      %v3241 = vld [vmem:[%s5 + $0x5c] sm:$0xf]
      %v3242 = vld [vmem:[%s5 + $0x60] sm:$0xf]
      %v3243 = vld [vmem:[%s5 + $0x64] sm:$0xf]
      %v3244 = vld [vmem:[%s5 + $0x68] sm:$0xf]
      %v3245 = vld [vmem:[%s5 + $0x6c] sm:$0xf]
      %v3246 = vld [vmem:[%s5 + $0x70] sm:$0xf]
      %v3247 = vld [vmem:[%s5 + $0x74] sm:$0xf]
      %v3248 = vld [vmem:[%s5 + $0x78] sm:$0xf]
      %v3249 = vld [vmem:[%s5 + $0x7c] sm:$0xf]
      %v3250 = vld [vmem:[%s5 + $0x80] sm:$0xf]
      %v3251 = vld [vmem:[%s5 + $0x84] sm:$0xf]
      %v3252 = vld [vmem:[%s5 + $0x88] sm:$0xf]
      %v3253 = vld [vmem:[%s5 + $0x8c] sm:$0xf]
      %v3254 = vld [vmem:[%s5 + $0x90] sm:$0xf]
      %v3255 = vld [vmem:[%s5 + $0x94] sm:$0xf]
      %v3256 = vld [vmem:[%s5 + $0x98] sm:$0xf]
      %v3257 = vld [vmem:[%s5 + $0x9c] sm:$0xf]
      %v3258 = vld [vmem:[%s5 + $0xa0] sm:$0xf]
      %v3259 = vld [vmem:[%s5 + $0xa4] sm:$0xf]
      %v3260 = vld [vmem:[%s5 + $0xa8] sm:$0xf]
      %v3261 = vld [vmem:[%s5 + $0xac] sm:$0xf]
      %v3262 = vld [vmem:[%s5 + $0xb0] sm:$0xf]
      %v3263 = vld [vmem:[%s5 + $0xb4] sm:$0xf]
      %v3264 = vld [vmem:[%s5 + $0xb8] sm:$0xf]
      %v3265 = vld [vmem:[%s5 + $0xbc] sm:$0xf]
      %v3266 = vld [vmem:[%s5 + $0xc0] sm:$0xf]
      %v3267 = vld [vmem:[%s5 + $0xc4] sm:$0xf]
      %v3268 = vld [vmem:[%s5 + $0xc8] sm:$0xf]
      %v3269 = vld [vmem:[%s5 + $0xcc] sm:$0xf]
      %v3270 = vld [vmem:[%s5 + $0xd0] sm:$0xf]
      %v3271 = vld [vmem:[%s5 + $0xd4] sm:$0xf]
      %v3272 = vld [vmem:[%s5 + $0xd8] sm:$0xf]
      %v3273 = vld [vmem:[%s5 + $0xdc] sm:$0xf]
      %v3274 = vld [vmem:[%s5 + $0xe0] sm:$0xf]
      %v3275 = vld [vmem:[%s5 + $0xe4] sm:$0xf]
      %v3276 = vld [vmem:[%s5 + $0xe8] sm:$0xf]
      %v3277 = vld [vmem:[%s5 + $0xec] sm:$0xf]
      %v3278 = vld [vmem:[%s5 + $0xf0] sm:$0xf]
      %v3279 = vld [vmem:[%s5 + $0xf4] sm:$0xf]
      %v3280 = vld [vmem:[%s5 + $0xf8] sm:$0xf]
      %v3281 = vld [vmem:[%s5 + $0xfc] sm:$0xf]
      %v3282 = vld [vmem:[%s6] sm:$0x1]
      %v3284 = vlaneseq
      %v3285 = vshrl.u32 %v3284, 7
      %v3286 = vsub.s32 0, %v3285
      %v3287 = vrot.slane %v3282, %v3286
      %v3353 = vunpack.c.l.b16 %v3218
      %v3354 = vunpack.c.l.b16 %v3219
      %v3355 = vunpack.c.l.b16 %v3220
      %v3356 = vunpack.c.l.b16 %v3221
      %v3357 = vunpack.c.l.b16 %v3222
      %v3358 = vunpack.c.l.b16 %v3223
      %v3359 = vunpack.c.l.b16 %v3224
      %v3360 = vunpack.c.l.b16 %v3225
      %v3361 = vunpack.c.l.b16 %v3226
      %v3362 = vunpack.c.l.b16 %v3227
      %v3363 = vunpack.c.l.b16 %v3228
      %v3364 = vunpack.c.l.b16 %v3229
      %v3365 = vunpack.c.l.b16 %v3230
      %v3366 = vunpack.c.l.b16 %v3231
      %v3367 = vunpack.c.l.b16 %v3232
      %v3368 = vunpack.c.l.b16 %v3233
      %v3369 = vunpack.c.l.b16 %v3234
      %v3370 = vunpack.c.l.b16 %v3235
      %v3371 = vunpack.c.l.b16 %v3236
      %v3372 = vunpack.c.l.b16 %v3237
      %v3373 = vunpack.c.l.b16 %v3238
      %v3374 = vunpack.c.l.b16 %v3239
      %v3375 = vunpack.c.l.b16 %v3240
      %v3376 = vunpack.c.l.b16 %v3241
      %v3377 = vunpack.c.l.b16 %v3242
      %v3378 = vunpack.c.l.b16 %v3243
      %v3379 = vunpack.c.l.b16 %v3244
      %v3380 = vunpack.c.l.b16 %v3245
      %v3381 = vunpack.c.l.b16 %v3246
      %v3382 = vunpack.c.l.b16 %v3247
      %v3383 = vunpack.c.l.b16 %v3248
      %v3384 = vunpack.c.l.b16 %v3249
      %v3385 = vunpack.c.l.b16 %v3250
      %v3386 = vunpack.c.l.b16 %v3251
      %v3387 = vunpack.c.l.b16 %v3252
      %v3388 = vunpack.c.l.b16 %v3253
      %v3389 = vunpack.c.l.b16 %v3254
      %v3390 = vunpack.c.l.b16 %v3255
      %v3391 = vunpack.c.l.b16 %v3256
      %v3392 = vunpack.c.l.b16 %v3257
      %v3393 = vunpack.c.l.b16 %v3258
      %v3394 = vunpack.c.l.b16 %v3259
      %v3395 = vunpack.c.l.b16 %v3260
      %v3396 = vunpack.c.l.b16 %v3261
      %v3397 = vunpack.c.l.b16 %v3262
      %v3398 = vunpack.c.l.b16 %v3263
      %v3399 = vunpack.c.l.b16 %v3264
      %v3400 = vunpack.c.l.b16 %v3265
      %v3401 = vunpack.c.l.b16 %v3266
      %v3402 = vunpack.c.l.b16 %v3267
      %v3403 = vunpack.c.l.b16 %v3268
      %v3404 = vunpack.c.l.b16 %v3269
      %v3405 = vunpack.c.l.b16 %v3270
      %v3406 = vunpack.c.l.b16 %v3271
      %v3407 = vunpack.c.l.b16 %v3272
      %v3408 = vunpack.c.l.b16 %v3273
      %v3409 = vunpack.c.l.b16 %v3274
      %v3410 = vunpack.c.l.b16 %v3275
      %v3411 = vunpack.c.l.b16 %v3276
      %v3412 = vunpack.c.l.b16 %v3277
      %v3413 = vunpack.c.l.b16 %v3278
      %v3414 = vunpack.c.l.b16 %v3279
      %v3415 = vunpack.c.l.b16 %v3280
      %v3416 = vunpack.c.l.b16 %v3281
      %v3417 = vpack.c.b16 %v3354, %v3353
      %v3418 = vpack.c.b16 %v3356, %v3355
      %v3419 = vpack.c.b16 %v3358, %v3357
      %v3420 = vpack.c.b16 %v3360, %v3359
      %v3421 = vpack.c.b16 %v3362, %v3361
      %v3422 = vpack.c.b16 %v3364, %v3363
      %v3423 = vpack.c.b16 %v3366, %v3365
      %v3424 = vpack.c.b16 %v3368, %v3367
      %v3425 = vpack.c.b16 %v3370, %v3369
      %v3426 = vpack.c.b16 %v3372, %v3371
      %v3427 = vpack.c.b16 %v3374, %v3373
      %v3428 = vpack.c.b16 %v3376, %v3375
      %v3429 = vpack.c.b16 %v3378, %v3377
      %v3430 = vpack.c.b16 %v3380, %v3379
      %v3431 = vpack.c.b16 %v3382, %v3381
      %v3432 = vpack.c.b16 %v3384, %v3383
      %v3433 = vpack.c.b16 %v3386, %v3385
      %v3434 = vpack.c.b16 %v3388, %v3387
      %v3435 = vpack.c.b16 %v3390, %v3389
      %v3436 = vpack.c.b16 %v3392, %v3391
      %v3437 = vpack.c.b16 %v3394, %v3393
      %v3438 = vpack.c.b16 %v3396, %v3395
      %v3439 = vpack.c.b16 %v3398, %v3397
      %v3440 = vpack.c.b16 %v3400, %v3399
      %v3441 = vpack.c.b16 %v3402, %v3401
      %v3442 = vpack.c.b16 %v3404, %v3403
      %v3443 = vpack.c.b16 %v3406, %v3405
      %v3444 = vpack.c.b16 %v3408, %v3407
      %v3445 = vpack.c.b16 %v3410, %v3409
      %v3446 = vpack.c.b16 %v3412, %v3411
      %v3447 = vpack.c.b16 %v3414, %v3413
      %v3448 = vpack.c.b16 %v3416, %v3415
      %3481 = vmatprep.subr.bf16.mxu0 0
      %3482 = vmatpush1.bf16.msra.mxu0 %v3424
      %3483 = vmatprep.subr.bf16.mxu0 0
      %3484 = vmatpush1.bf16.msra.mxu0 %v3423
      %3485 = vmatprep.subr.bf16.mxu0 0
      %3486 = vmatpush1.bf16.msra.mxu0 %v3422
      %3487 = vmatprep.subr.bf16.mxu0 0
      %3488 = vmatpush1.bf16.msra.mxu0 %v3421
      %3489 = vmatprep.subr.bf16.mxu0 0
      %3490 = vmatpush1.bf16.msra.mxu0 %v3420
      %3491 = vmatprep.subr.bf16.mxu0 0
      %3492 = vmatpush1.bf16.msra.mxu0 %v3419
      %3493 = vmatprep.subr.bf16.mxu0 0
      %3494 = vmatpush1.bf16.msra.mxu0 %v3418
      %3495 = vmatprep.subr.bf16.mxu0 0
      %3496 = vmatpush1.bf16.msra.mxu0 %v3417
      %3497 = vmatprep.subr.bf16.mxu0 0
      %3498 = vmatpush2.bf16.msra.mxu0 %v3432
      %3499 = vmatprep.subr.bf16.mxu0 0
      %3500 = vmatpush2.bf16.msra.mxu0 %v3431
      %3501 = vmatprep.subr.bf16.mxu0 0
      %3502 = vmatpush2.bf16.msra.mxu0 %v3430
      %3503 = vmatprep.subr.bf16.mxu0 0
      %3504 = vmatpush2.bf16.msra.mxu0 %v3429
      %3505 = vmatprep.subr.bf16.mxu0 0
      %3506 = vmatpush2.bf16.msra.mxu0 %v3428
      %3507 = vmatprep.subr.bf16.mxu0 0
      %3508 = vmatpush2.bf16.msra.mxu0 %v3427
      %3509 = vmatprep.subr.bf16.mxu0 0
      %3510 = vmatpush2.bf16.msra.mxu0 %v3426
      %3511 = vmatprep.subr.bf16.mxu0 0
      %3512 = vmatpush2.bf16.msra.mxu0 %v3425
      %3513 = vmatprep.mubr.bf16.mxu0 %v3215
      %3514 = vmatmul.mubr.bf16.gmra.mxu0 %v3214
      %v3515 = vpop.f32.mrf.mxu0
      %v3516 = vadd.f32 %v3287, %v3515
      %v3517 = vpop.f32.mrf.mxu0
      %v3518 = vpop.f32.mrf.mxu0
      %v3519 = vadd.f32 %v3287, %v3518
      %v3520 = vpop.f32.mrf.mxu0
      %3521 = vdwg.mxu0
      %3522 = vmatprep.subr.bf16.mxu0 0
      %3523 = vmatpush1.bf16.msra.mxu0 %v3440
      %3524 = vmatprep.subr.bf16.mxu0 0
      %3525 = vmatpush1.bf16.msra.mxu0 %v3439
      %3526 = vmatprep.subr.bf16.mxu0 0
      %3527 = vmatpush1.bf16.msra.mxu0 %v3438
      %3528 = vmatprep.subr.bf16.mxu0 0
      %3529 = vmatpush1.bf16.msra.mxu0 %v3437
      %3530 = vmatprep.subr.bf16.mxu0 0
      %3531 = vmatpush1.bf16.msra.mxu0 %v3436
      %3532 = vmatprep.subr.bf16.mxu0 0
      %3533 = vmatpush1.bf16.msra.mxu0 %v3435
      %3534 = vmatprep.subr.bf16.mxu0 0
      %3535 = vmatpush1.bf16.msra.mxu0 %v3434
      %3536 = vmatprep.subr.bf16.mxu0 0
      %3537 = vmatpush1.bf16.msra.mxu0 %v3433
      %3538 = vmatprep.subr.bf16.mxu0 0
      %3539 = vmatpush2.bf16.msra.mxu0 %v3448
      %3540 = vmatprep.subr.bf16.mxu0 0
      %3541 = vmatpush2.bf16.msra.mxu0 %v3447
      %3542 = vmatprep.subr.bf16.mxu0 0
      %3543 = vmatpush2.bf16.msra.mxu0 %v3446
      %3544 = vmatprep.subr.bf16.mxu0 0
      %3545 = vmatpush2.bf16.msra.mxu0 %v3445
      %3546 = vmatprep.subr.bf16.mxu0 0
      %3547 = vmatpush2.bf16.msra.mxu0 %v3444
      %3548 = vmatprep.subr.bf16.mxu0 0
      %3549 = vmatpush2.bf16.msra.mxu0 %v3443
      %3550 = vmatprep.subr.bf16.mxu0 0
      %3551 = vmatpush2.bf16.msra.mxu0 %v3442
      %3552 = vmatprep.subr.bf16.mxu0 0
      %3553 = vmatpush2.bf16.msra.mxu0 %v3441
      %3554 = vmatprep.mubr.bf16.mxu0 %v3217
      %3555 = vmatmul.mubr.bf16.gmra.mxu0 %v3216
      %v3556 = vpop.f32.mrf.mxu0
      %v3557 = vadd.f32 %v3516, %v3556
      %v3558 = vpop.f32.mrf.mxu0
      %v3559 = vpop.f32.mrf.mxu0
      %v3560 = vadd.f32 %v3519, %v3559
      %v3561 = vpop.f32.mrf.mxu0
      %3562 = vdwg.mxu0
      %3563 = vst [vmem:[%s283] sm:$0xff] %v3557
      %3564 = vst [vmem:[%s283 + $0x8] sm:$0xff] %v3560
      %s3565 = smul.u32 2, %s18
      %p3566 = scmp.lt.s32.totalorder %s3565, 7
      %s3567 = scalar_select %p3566, %s3565, 7
      %s3568 = smul.addr %s3567, 8
      %s3569 = scalar_lea.vmem %s7, %s3568
      // Predicated region
      $region49: #{_lambda_.1} parent=47 // pred_check
        %p3570 = pneg %p188
      $region50: #{_lambda_.1} parent=47 // pred_check_branch
        %3572 = sbr.rel (%p3570) target = $region52
      $region51: #{_lambda_.1} parent=47 // pred_region
        %s3573 = smul.u32 2, %s18
      $region52: #{_lambda_.1} parent=47 // pred_fallthru
        _
    $region48: #{_lambda_.1} parent=5 // pred_fallthru
      _
    %p3574 = scmp.le.s32.totalorder 2, %s13
    // Predicated region
    $region53: #{_lambda_.1} parent=5 // pred_check
      %p3575 = pneg %p3574
    $region54: #{_lambda_.1} parent=5 // pred_check_branch
      %3577 = sbr.rel (%p3575) target = $region56
    $region55: #{_lambda_.1} parent=5 // pred_region
      %s3578 = ssub.s32 %s13, 2
      // Predicated region
      $region57: #{_lambda_.1} parent=55 // pred_check
        %p3579 = pneg %p194
      $region58: #{_lambda_.1} parent=55 // pred_check_branch
        %3581 = sbr.rel (%p3579) target = $region60
      $region59: #{_lambda_.1} parent=55 // pred_region
        %s3582 = smul.u32 2, %s19
        %p3583 = scmp.lt.s32.totalorder %s3582, 7
        %s3584 = scalar_select %p3583, %s3582, 7
        %s3585 = smul.addr %s3584, 8
        %s3586 = scalar_lea.vmem %s7, %s3585
      $region60: #{_lambda_.1} parent=55 // pred_fallthru
        _
    $region56: #{_lambda_.1} parent=5 // pred_fallthru
      _
  $region6: #{_lambda_.1} parent=0 // loop_footer
    %s17 = sadd.s32 1, %s13
  $region7: #{_lambda_.1} parent=0 // loop_footer_branch
    %12 = sbr.rel target = $region3
  $region8: #{_lambda_.1} parent=0 // loop_exit
    _

</llo_original>
